<compile_context>
chip_gen: v6e
topology: v6e:2x2x1
jax: 0.10.0
libtpu: 0.0.40
codegen_flags: <defaults>
</compile_context>

<pallas_src>
import functools

import jax
import jax.numpy as jnp
from jax.experimental import pallas as pl
from jax.experimental.pallas import tpu as pltpu

EPS = 1e-3


def _se_conv_bn_kernel(s_ref, x_ref, w_ref, g_ref, b_ref, o_ref, *, m_true):
    # s_ref: (1, tk)      SE gate logits for this Cin chunk
    # x_ref: (tk, Mp)     activation chunk (channels-major, spatially flattened, zero-padded)
    # w_ref: (tc, tk)     1x1-conv weight chunk, (Cout, Cin) orientation
    # g_ref, b_ref: (tc, 1) BN affine params
    # o_ref: (tc, Mp)     resident accumulator / output block
    k = pl.program_id(1)

    # Fold the sigmoid gate into the (tiny) weight chunk instead of the big activation:
    # sigmoid(s) * x @ w  ==  (sigmoid(s) * w) @ x   (gate is per input channel).
    w_scaled = (w_ref[...] * jax.nn.sigmoid(s_ref[...])).astype(jnp.bfloat16)   # (tc, tk)
    x_bf16 = x_ref[...].astype(jnp.bfloat16)                                    # (tk, Mp)

    # Natural (M,K)x(K,N) MXU matmul; accumulate in f32.
    part = jnp.dot(w_scaled, x_bf16, preferred_element_type=jnp.float32)        # (tc, Mp)

    @pl.when(k == 0)
    def _():
        o_ref[...] = part

    @pl.when(k != 0)
    def _():
        o_ref[...] = o_ref[...] + part

    # Last reduction step: BatchNorm2d (training-mode biased batch stats over the true
    # M positions), single-pass stats, affine folded into one per-channel scale/shift.
    @pl.when(k == pl.num_programs(1) - 1)
    def _():
        y = o_ref[...]                                           # (tc, Mp)
        inv_m = 1.0 / m_true
        s1 = jnp.sum(y, axis=1, keepdims=True)                   # padded cols contribute 0
        s2 = jnp.sum(y * y, axis=1, keepdims=True)
        mean = s1 * inv_m                                        # (tc, 1)
        var = s2 * inv_m - mean * mean
        a = jax.lax.rsqrt(var + EPS) * g_ref[...]                # (tc, 1)
        b = b_ref[...] - mean * a
        o_ref[...] = y * a + b


def _default_cout_split():
    # v7x has 2 TensorCores per chip: split Cout across a parallel grid axis there.
    # On v5e/v6e (1 TC) a split only adds grid-step overhead, so keep it at 1.
    try:
        kind = (jax.devices()[0].device_kind or "").lower()
    except Exception:
        return 1
    return 2 if "v7" in kind else 1


def se_conv_bn(x_nchw, scale_nc11, w_oihw, gamma, beta, *, block_cin=256, cout_split=None):
    """x_nchw: (N, Cin, H, W); scale_nc11: (N, Cin, 1, 1); w_oihw: (Cout, Cin, 1, 1)."""
    N, Cin, H, W = x_nchw.shape
    Cout = w_oihw.shape[0]
    # TODO(synk): N > 1 needs a per-sample SE gate (broadcast along M); the reference
    # module is batch-1, so we keep the simple single-sample layout here.
    assert N == 1, "kernel assumes batch size 1 (as in the reference module)"
    M = H * W

    # Pad the reduction dim to a multiple of block_cin (full MXU contraction-depth passes,
    # 2 pipelined chunks) and the spatial dim to a multiple of 128 (lane-dense loads/stores).
    # Zero-padded rows/cols are mathematically inert (0-weight and 0-activation).
    cin_pad = pl.cdiv(Cin, block_cin) * block_cin
    m_pad = pl.cdiv(M, 128) * 128
    nk = cin_pad // block_cin

    if cout_split is None:
        cout_split = _default_cout_split()
    if Cout % cout_split != 0 or (Cout // cout_split) % 8 != 0:
        cout_split = 1
    tc = Cout // cout_split

    x2d = jnp.pad(x_nchw.reshape(Cin, M), ((0, cin_pad - Cin), (0, m_pad - M)))
    s2d = jnp.pad(scale_nc11.reshape(1, Cin), ((0, 0), (0, cin_pad - Cin)))
    w2d = jnp.pad(w_oihw[:, :, 0, 0], ((0, 0), (0, cin_pad - Cin)))      # (Cout, cin_pad)
    g2d = gamma.reshape(Cout, 1)
    b2d = beta.reshape(Cout, 1)

    kernel = functools.partial(_se_conv_bn_kernel, m_true=float(M))

    out2d = pl.pallas_call(
        kernel,
        out_shape=jax.ShapeDtypeStruct((Cout, m_pad), jnp.float32),
        grid=(cout_split, nk),                                   # reduction axis last
        in_specs=[
            pl.BlockSpec((1, block_cin), lambda c, k: (0, k)),          # gate chunk
            pl.BlockSpec((block_cin, m_pad), lambda c, k: (k, 0)),      # activation chunk
            pl.BlockSpec((tc, block_cin), lambda c, k: (c, k)),         # weight chunk
            pl.BlockSpec((tc, 1), lambda c, k: (c, 0)),                 # gamma
            pl.BlockSpec((tc, 1), lambda c, k: (c, 0)),                 # beta
        ],
        out_specs=pl.BlockSpec((tc, m_pad), lambda c, k: (c, 0)),       # resident accumulator
        compiler_params=pltpu.CompilerParams(
            dimension_semantics=("parallel", "arbitrary")),
    )(s2d, x2d, w2d, g2d, b2d)

    return out2d[:, :M].reshape(N, Cout, H, W)


def _reference(x_nchw, scale_nc11, w_oihw, gamma, beta):
    xs = jax.nn.sigmoid(scale_nc11) * x_nchw                     # (N, Cin, H, W)
    y = jnp.einsum("nchw,oc->nohw", xs, w_oihw[:, :, 0, 0])      # 1x1 conv, no bias
    mean = jnp.mean(y, axis=(0, 2, 3), keepdims=True)
    var = jnp.mean((y - mean) ** 2, axis=(0, 2, 3), keepdims=True)
    gn = (y - mean) * jax.lax.rsqrt(var + EPS)
    return gn * gamma.reshape(1, -1, 1, 1) + beta.reshape(1, -1, 1, 1)


if __name__ == "__main__":
    key = jax.random.PRNGKey(0)
    k1, k2, k3, k4, k5 = jax.random.split(key, 5)

    N, Cin, H, W, Cout = 1, 480, 28, 28, 80

    x247 = jax.random.normal(k1, (N, Cin, H, W), dtype=jnp.float32)   # main feature map
    x251 = jax.random.normal(k2, (N, Cin, 1, 1), dtype=jnp.float32)   # SE gate logits
    w = jax.random.normal(k3, (Cout, Cin, 1, 1), dtype=jnp.float32) * 0.05
    gamma = 1.0 + 0.1 * jax.random.normal(k4, (Cout,), dtype=jnp.float32)
    beta = 0.1 * jax.random.normal(k5, (Cout,), dtype=jnp.float32)

    out = se_conv_bn(x247, x251, w, gamma, beta)
    out = jax.block_until_ready(out)

    ref = _reference(x247, x251, w, gamma, beta)
    assert out.shape == (N, Cout, H, W), out.shape
    # bf16 matmul operands (f32 accumulation) -> slightly looser tolerance than pure f32.
    assert jnp.allclose(out, ref, atol=3e-2, rtol=3e-2), float(
        jnp.max(jnp.abs(out - ref)))

    print("KERNEL_OK")
</pallas_src>

<mosaic_0001>
module attributes {stable_mosaic.version = 11 : i64} {
  func.func @_se_conv_bn_kernel(%arg0: i32, %arg1: i32, %arg2: memref<1x256xf32, #tpu.memory_space<vmem>>, %arg3: memref<256x896xf32, #tpu.memory_space<vmem>>, %arg4: memref<80x256xf32, #tpu.memory_space<vmem>>, %arg5: memref<80x1xf32, #tpu.memory_space<vmem>>, %arg6: memref<80x1xf32, #tpu.memory_space<vmem>>, %arg7: memref<80x896xf32, #tpu.memory_space<vmem>>) attributes {dimension_semantics = [#tpu.dimension_semantics<parallel>, #tpu.dimension_semantics<arbitrary>], iteration_bounds = array<i64: 1, 2>, scalar_prefetch = 0 : i64, scratch_operands = 0 : i64, tpu.core_type = #tpu.core_type<tc>, window_params = [{transform_indices = @transform_0, window_bounds = array<i64: 1, 256>}, {transform_indices = @transform_1, window_bounds = array<i64: 256, 896>}, {transform_indices = @transform_2, window_bounds = array<i64: 80, 256>}, {transform_indices = @transform_3, window_bounds = array<i64: 80, 1>}, {transform_indices = @transform_4, window_bounds = array<i64: 80, 1>}, {transform_indices = @transform_5, window_bounds = array<i64: 80, 896>}]} {
    %c0 = arith.constant 0 : index
    %c0_0 = arith.constant 0 : index
    %0 = vector.load %arg4[%c0, %c0_0] : memref<80x256xf32, #tpu.memory_space<vmem>>, vector<80x256xf32>
    %c0_1 = arith.constant 0 : index
    %c0_2 = arith.constant 0 : index
    %1 = vector.load %arg2[%c0_1, %c0_2] : memref<1x256xf32, #tpu.memory_space<vmem>>, vector<1x256xf32>
    %2 = arith.negf %1 : vector<1x256xf32>
    %3 = math.exp %2 : vector<1x256xf32>
    %cst = arith.constant 1.000000e+00 : f32
    %4 = vector.broadcast %cst : f32 to vector<1x256xf32>
    %5 = arith.addf %4, %3 : vector<1x256xf32>
    %6 = arith.divf %4, %5 : vector<1x256xf32>
    %7 = vector.broadcast %6 : vector<1x256xf32> to vector<80x256xf32>
    %8 = arith.mulf %0, %7 : vector<80x256xf32>
    %9 = arith.truncf %8 : vector<80x256xf32> to vector<80x256xbf16>
    %c0_3 = arith.constant 0 : index
    %c0_4 = arith.constant 0 : index
    %10 = vector.load %arg3[%c0_3, %c0_4] : memref<256x896xf32, #tpu.memory_space<vmem>>, vector<256x896xf32>
    %11 = arith.truncf %10 : vector<256x896xf32> to vector<256x896xbf16>
    %cst_5 = arith.constant dense<0.000000e+00> : vector<80x896xf32>
    %12 = tpu.matmul %9, %11, %cst_5 {dimension_numbers = #tpu.dot_dimension_numbers<[1], [0], [0], [1], [0, 0, 1, 1], [], []>} : vector<80x256xbf16>, vector<256x896xbf16>, vector<80x896xf32> -> vector<80x896xf32>
    %c0_i32 = arith.constant 0 : i32
    %13 = arith.cmpi eq, %arg1, %c0_i32 : i32
    %14 = arith.extui %13 : i1 to i32
    %c0_i32_6 = arith.constant 0 : i32
    %15 = arith.cmpi ne, %14, %c0_i32_6 : i32
    scf.if %15 {
      %c0_10 = arith.constant 0 : index
      %c0_11 = arith.constant 0 : index
      %22 = vector.load %arg7[%c0_10, %c0_11] : memref<80x896xf32, #tpu.memory_space<vmem>>, vector<80x896xf32>
      tpu.vector_store %arg7[%c0_10, %c0_11], %12 {strides = array<i32>} : memref<80x896xf32, #tpu.memory_space<vmem>>, vector<80x896xf32>,
    } else {
    }
    %c0_i32_7 = arith.constant 0 : i32
    %16 = arith.cmpi ne, %arg1, %c0_i32_7 : i32
    %17 = arith.extui %16 : i1 to i32
    %c0_i32_8 = arith.constant 0 : i32
    %18 = arith.cmpi ne, %17, %c0_i32_8 : i32
    scf.if %18 {
      %c0_10 = arith.constant 0 : index
      %c0_11 = arith.constant 0 : index
      %22 = vector.load %arg7[%c0_10, %c0_11] : memref<80x896xf32, #tpu.memory_space<vmem>>, vector<80x896xf32>
      %23 = arith.addf %22, %12 : vector<80x896xf32>
      %c0_12 = arith.constant 0 : index
      %c0_13 = arith.constant 0 : index
      %24 = vector.load %arg7[%c0_12, %c0_13] : memref<80x896xf32, #tpu.memory_space<vmem>>, vector<80x896xf32>
      tpu.vector_store %arg7[%c0_12, %c0_13], %23 {strides = array<i32>} : memref<80x896xf32, #tpu.memory_space<vmem>>, vector<80x896xf32>,
    } else {
    }
    %c1_i32 = arith.constant 1 : i32
    %19 = arith.cmpi eq, %arg1, %c1_i32 : i32
    %20 = arith.extui %19 : i1 to i32
    %c0_i32_9 = arith.constant 0 : i32
    %21 = arith.cmpi ne, %20, %c0_i32_9 : i32
    scf.if %21 {
      %c0_10 = arith.constant 0 : index
      %c0_11 = arith.constant 0 : index
      %22 = vector.load %arg7[%c0_10, %c0_11] : memref<80x896xf32, #tpu.memory_space<vmem>>, vector<80x896xf32>
      %cst_12 = arith.constant dense<0.000000e+00> : vector<80xf32>
      %23 = vector.multi_reduction <add>, %22, %cst_12 [1] : vector<80x896xf32> to vector<80xf32>
      %24 = vector.shape_cast %23 : vector<80xf32> to vector<80x1xf32>
      %25 = arith.mulf %22, %22 : vector<80x896xf32>
      %cst_13 = arith.constant dense<0.000000e+00> : vector<80xf32>
      %26 = vector.multi_reduction <add>, %25, %cst_13 [1] : vector<80x896xf32> to vector<80xf32>
      %27 = vector.shape_cast %26 : vector<80xf32> to vector<80x1xf32>
      %cst_14 = arith.constant 0.00127551018 : f32
      %28 = vector.broadcast %cst_14 : f32 to vector<80x1xf32>
      %29 = arith.mulf %24, %28 : vector<80x1xf32>
      %cst_15 = arith.constant 0.00127551018 : f32
      %30 = vector.broadcast %cst_15 : f32 to vector<80x1xf32>
      %31 = arith.mulf %27, %30 : vector<80x1xf32>
      %32 = arith.mulf %29, %29 : vector<80x1xf32>
      %33 = arith.subf %31, %32 : vector<80x1xf32>
      %cst_16 = arith.constant 1.000000e-03 : f32
      %34 = vector.broadcast %cst_16 : f32 to vector<80x1xf32>
      %35 = arith.addf %33, %34 : vector<80x1xf32>
      %36 = math.rsqrt %35 : vector<80x1xf32>
      %c0_17 = arith.constant 0 : index
      %c0_18 = arith.constant 0 : index
      %37 = vector.load %arg5[%c0_17, %c0_18] : memref<80x1xf32, #tpu.memory_space<vmem>>, vector<80x1xf32>
      %38 = arith.mulf %36, %37 : vector<80x1xf32>
      %c0_19 = arith.constant 0 : index
      %c0_20 = arith.constant 0 : index
      %39 = vector.load %arg6[%c0_19, %c0_20] : memref<80x1xf32, #tpu.memory_space<vmem>>, vector<80x1xf32>
      %40 = arith.mulf %29, %38 : vector<80x1xf32>
      %41 = arith.subf %39, %40 : vector<80x1xf32>
      %42 = vector.broadcast %38 : vector<80x1xf32> to vector<80x896xf32>
      %43 = arith.mulf %22, %42 : vector<80x896xf32>
      %44 = vector.broadcast %41 : vector<80x1xf32> to vector<80x896xf32>
      %45 = arith.addf %43, %44 : vector<80x896xf32>
      %c0_21 = arith.constant 0 : index
      %c0_22 = arith.constant 0 : index
      %46 = vector.load %arg7[%c0_21, %c0_22] : memref<80x896xf32, #tpu.memory_space<vmem>>, vector<80x896xf32>
      tpu.vector_store %arg7[%c0_21, %c0_22], %45 {strides = array<i32>} : memref<80x896xf32, #tpu.memory_space<vmem>>, vector<80x896xf32>,
    } else {
    }
    return
  }
  func.func @transform_0(%arg0: i32, %arg1: i32) -> (i32, i32) {
    %c0_i32 = arith.constant 0 : i32
    %c0_i32_0 = arith.constant 0 : i32
    return %c0_i32, %arg1 : i32, i32
  }
  func.func @transform_1(%arg0: i32, %arg1: i32) -> (i32, i32) {
    %c0_i32 = arith.constant 0 : i32
    %c0_i32_0 = arith.constant 0 : i32
    return %arg1, %c0_i32 : i32, i32
  }
  func.func @transform_2(%arg0: i32, %arg1: i32) -> (i32, i32) {
    %c0_i32 = arith.constant 0 : i32
    return %arg0, %arg1 : i32, i32
  }
  func.func @transform_3(%arg0: i32, %arg1: i32) -> (i32, i32) {
    %c0_i32 = arith.constant 0 : i32
    %c0_i32_0 = arith.constant 0 : i32
    return %arg0, %c0_i32 : i32, i32
  }
  func.func @transform_4(%arg0: i32, %arg1: i32) -> (i32, i32) {
    %c0_i32 = arith.constant 0 : i32
    %c0_i32_0 = arith.constant 0 : i32
    return %arg0, %c0_i32 : i32, i32
  }
  func.func @transform_5(%arg0: i32, %arg1: i32) -> (i32, i32) {
    %c0_i32 = arith.constant 0 : i32
    %c0_i32_0 = arith.constant 0 : i32
    return %arg0, %c0_i32 : i32, i32
  }
}

</mosaic_0001>

<llo_original>
// kernel: tpu_custom_call.1
$region0: #{tpu_custom_call.1}
  #allocation0 [shape = 'u32[]', space=smem, size = 0x4, offset = 0x4, fixed_abs, tag = 'smem constant byte address 0x4 - core index']
  #allocation1 [shape = 'u32[144,128]{1,0:T(1,128)}', space=vmem, size = 0x12000, scoped, tag = 'internal scratch']
  %s0 = inlined_call_operand.hbm [shape: f32[1,512], index: 0, kind: input, shape index: {}]
  %s1 = inlined_call_operand.hbm [shape: f32[512,896], index: 1, kind: input, shape index: {}]
  %s2 = inlined_call_operand.hbm [shape: f32[80,512], index: 2, kind: input, shape index: {}]
  %s3 = inlined_call_operand.vmem [shape: f32[80,1], index: 3, kind: input, shape index: {}]
  %s4 = inlined_call_operand.vmem [shape: f32[80,1], index: 4, kind: input, shape index: {}]
  %s5 = inlined_call_operand.hbm [shape: f32[80,896], index: 5, kind: output, shape index: {}]
  %s6 = sld [smem:[#allocation0]]
  $region77: #{tpu_custom_call.1} parent=0
    _
  %s8 = ssub.s32 1, %s6
  %s9 = scalar_select 0, %s8, %s6
  $region1: #{tpu_custom_call.1} parent=0
    #allocation2 [shape = 'u8[2048]{0}', space=vmem, size = 0x800, scoped, tag = 'input window, operand 0']
    #allocation3 [shape = 's32[2]{0}', space=sflag, size = 0x8, scoped, tag = 'scoped memory for tpu_custom_call.1']
    #allocation4 [shape = 's32[2]{0}', space=sflag, size = 0x8, scoped, tag = 'scoped memory for tpu_custom_call.1']
    #allocation5 [shape = 'u8[1835008]{0}', space=vmem, size = 0x1c0000, scoped, tag = 'input window, operand 1']
    #allocation6 [shape = 's32[2]{0}', space=sflag, size = 0x8, scoped, tag = 'scoped memory for tpu_custom_call.1']
    #allocation7 [shape = 'u8[163840]{0}', space=vmem, size = 0x28000, scoped, tag = 'input window, operand 2']
    #allocation8 [shape = 'u8[286720]{0}', space=vmem, size = 0x46000, scoped, tag = 'output window, operand 0, single buffered']
    %10 = vsyncpa [#allocation3], 0
    %s11 = scalar_lea.sflag [#allocation3], 1
    %12 = vsyncpa %s11, 0
    %13 = vsyncpa [#allocation6], 0
    %s14 = scalar_lea.sflag [#allocation6], 1
    %15 = vsyncpa %s14, 0
    %16 = vsyncpa [#allocation4], 0
    loop: start=0, step=1, limit=4
    $region2: #{tpu_custom_call.1} parent=1 // loop_pre_header
      _
    $region3: #{tpu_custom_call.1} parent=1 // loop_header
      %s18 = sphi 0, %s22
      %p19 = scmp.ge.s32.totalorder %s18, 4
      %s25 = sphi 0, %s37
      %s26 = sphi 0, %s33
      %s27 = sphi 0, %s25
      %s28 = sphi 0, %s26
      %s29 = sphi 0, %s27
      %s30 = sphi 0, %s28
      %s40 = sphi 0, %s42
      %s43 = sphi 0, %s40
      %s44 = sphi 0, %s43
      %s60 = sphi 0, %s44
      %s66 = sphi 0, %s68
      %s69 = sphi 0, %s66
      %s70 = sphi 0, %s69
      %s86 = sphi 0, %s70
      %s94 = sphi 0, %s96
      %s97 = sphi 0, %s94
      %s98 = sphi 0, %s97
      %s114 = sphi 0, %s98
      %s120 = sphi 0, %s122
      %s123 = sphi 0, %s120
      %s124 = sphi 0, %s123
      %s140 = sphi 0, %s124
      %s146 = sphi 0, %s148
      %s149 = sphi 0, %s146
      %s150 = sphi 0, %s149
      %s166 = sphi 0, %s150
      %s172 = sphi 0, %s174
      %s175 = sphi 0, %s172
      %s176 = sphi 0, %s175
      %s192 = sphi 0, %s176
    $region4: #{tpu_custom_call.1} parent=1 // loop_header_branch
      %21 = sbr.rel (%p19) target = $region8
    $region5: #{tpu_custom_call.1} parent=1 // loop_body
      %s23 = ssub.s32 %s18, 1
      %s24 = ssub.s32 %s18, 2
      %s31 = sadd.s32 1, %s26
      %p32 = scmp.ge.s32.totalorder %s31, 2
      %s33 = scalar_select %p32, 0, %s31
      %s34 = sadd.s32 1, %s25
      %s35 = scalar_select %p32, %s34, %s25
      %p36 = scmp.ge.s32.totalorder %s35, 1
      %s37 = scalar_select %p36, 0, %s35
      %s38 = ssub.s32 %s26, %s33
      %p39 = scmp.eq.s32.totalorder %s38, 0
      %s41 = sadd.s32 %s40, 1
      %s42 = scalar_select %p39, %s40, %s41
      %p45 = pneg %p39
      %p46 = scmp.eq.s32.totalorder %s18, 1
      %p47 = por %p45, %p46
      %p48 = scmp.ne.s32.totalorder %s40, %s43
      %p49 = scmp.eq.s32.totalorder %s18, 0
      %p50 = por %p48, %p49
      %p51 = scmp.ne.s32.totalorder %s40, %s43
      %p52 = scmp.eq.s32.totalorder %s23, 1
      %p53 = por %p51, %p52
      %p54 = scmp.ne.s32.totalorder %s43, %s44
      %p55 = scmp.eq.s32.totalorder %s23, 0
      %p56 = por %p54, %p55
      %p57 = scmp.ne.s32.totalorder %s43, %s44
      %p58 = scmp.eq.s32.totalorder %s24, 1
      %p59 = por %p57, %p58
      %p61 = scmp.ne.s32.totalorder %s44, %s60
      %p62 = scmp.eq.s32.totalorder %s24, 0
      %p63 = por %p61, %p62
      %s64 = ssub.s32 %s26, %s33
      %p65 = scmp.eq.s32.totalorder %s64, 0
      %s67 = sadd.s32 %s66, 1
      %s68 = scalar_select %p65, %s66, %s67
      %p71 = pneg %p65
      %p72 = scmp.eq.s32.totalorder %s18, 1
      %p73 = por %p71, %p72
      %p74 = scmp.ne.s32.totalorder %s66, %s69
      %p75 = scmp.eq.s32.totalorder %s18, 0
      %p76 = por %p74, %p75
      %p77 = scmp.ne.s32.totalorder %s66, %s69
      %p78 = scmp.eq.s32.totalorder %s23, 1
      %p79 = por %p77, %p78
      %p80 = scmp.ne.s32.totalorder %s69, %s70
      %p81 = scmp.eq.s32.totalorder %s23, 0
      %p82 = por %p80, %p81
      %p83 = scmp.ne.s32.totalorder %s69, %s70
      %p84 = scmp.eq.s32.totalorder %s24, 1
      %p85 = por %p83, %p84
      %p87 = scmp.ne.s32.totalorder %s70, %s86
      %p88 = scmp.eq.s32.totalorder %s24, 0
      %p89 = por %p87, %p88
      %s90 = ssub.s32 %s25, %s37
      %s91 = ssub.s32 %s26, %s33
      %s92 = sor.u32 %s90, %s91
      %p93 = scmp.eq.s32.totalorder %s92, 0
      %s95 = sadd.s32 %s94, 1
      %s96 = scalar_select %p93, %s94, %s95
      %p99 = pneg %p93
      %p100 = scmp.eq.s32.totalorder %s18, 1
      %p101 = por %p99, %p100
      %p102 = scmp.ne.s32.totalorder %s94, %s97
      %p103 = scmp.eq.s32.totalorder %s18, 0
      %p104 = por %p102, %p103
      %p105 = scmp.ne.s32.totalorder %s94, %s97
      %p106 = scmp.eq.s32.totalorder %s23, 1
      %p107 = por %p105, %p106
      %p108 = scmp.ne.s32.totalorder %s97, %s98
      %p109 = scmp.eq.s32.totalorder %s23, 0
      %p110 = por %p108, %p109
      %p111 = scmp.ne.s32.totalorder %s97, %s98
      %p112 = scmp.eq.s32.totalorder %s24, 1
      %p113 = por %p111, %p112
      %p115 = scmp.ne.s32.totalorder %s98, %s114
      %p116 = scmp.eq.s32.totalorder %s24, 0
      %p117 = por %p115, %p116
      %s118 = ssub.s32 %s25, %s37
      %p119 = scmp.eq.s32.totalorder %s118, 0
      %s121 = sadd.s32 %s120, 1
      %s122 = scalar_select %p119, %s120, %s121
      %p125 = pneg %p119
      %p126 = scmp.eq.s32.totalorder %s18, 1
      %p127 = por %p125, %p126
      %p128 = scmp.ne.s32.totalorder %s120, %s123
      %p129 = scmp.eq.s32.totalorder %s18, 0
      %p130 = por %p128, %p129
      %p131 = scmp.ne.s32.totalorder %s120, %s123
      %p132 = scmp.eq.s32.totalorder %s23, 1
      %p133 = por %p131, %p132
      %p134 = scmp.ne.s32.totalorder %s123, %s124
      %p135 = scmp.eq.s32.totalorder %s23, 0
      %p136 = por %p134, %p135
      %p137 = scmp.ne.s32.totalorder %s123, %s124
      %p138 = scmp.eq.s32.totalorder %s24, 1
      %p139 = por %p137, %p138
      %p141 = scmp.ne.s32.totalorder %s124, %s140
      %p142 = scmp.eq.s32.totalorder %s24, 0
      %p143 = por %p141, %p142
      %s144 = ssub.s32 %s25, %s37
      %p145 = scmp.eq.s32.totalorder %s144, 0
      %s147 = sadd.s32 %s146, 1
      %s148 = scalar_select %p145, %s146, %s147
      %p151 = pneg %p145
      %p152 = scmp.eq.s32.totalorder %s18, 1
      %p153 = por %p151, %p152
      %p154 = scmp.ne.s32.totalorder %s146, %s149
      %p155 = scmp.eq.s32.totalorder %s18, 0
      %p156 = por %p154, %p155
      %p157 = scmp.ne.s32.totalorder %s146, %s149
      %p158 = scmp.eq.s32.totalorder %s23, 1
      %p159 = por %p157, %p158
      %p160 = scmp.ne.s32.totalorder %s149, %s150
      %p161 = scmp.eq.s32.totalorder %s23, 0
      %p162 = por %p160, %p161
      %p163 = scmp.ne.s32.totalorder %s149, %s150
      %p164 = scmp.eq.s32.totalorder %s24, 1
      %p165 = por %p163, %p164
      %p167 = scmp.ne.s32.totalorder %s150, %s166
      %p168 = scmp.eq.s32.totalorder %s24, 0
      %p169 = por %p167, %p168
      %s170 = ssub.s32 %s25, %s37
      %p171 = scmp.eq.s32.totalorder %s170, 0
      %s173 = sadd.s32 %s172, 1
      %s174 = scalar_select %p171, %s172, %s173
      %p177 = pneg %p171
      %p178 = scmp.eq.s32.totalorder %s18, 1
      %p179 = por %p177, %p178
      %p180 = scmp.ne.s32.totalorder %s172, %s175
      %p181 = scmp.eq.s32.totalorder %s18, 0
      %p182 = por %p180, %p181
      %p183 = scmp.ne.s32.totalorder %s172, %s175
      %p184 = scmp.eq.s32.totalorder %s23, 1
      %p185 = por %p183, %p184
      %p186 = scmp.ne.s32.totalorder %s175, %s176
      %p187 = scmp.eq.s32.totalorder %s23, 0
      %p188 = por %p186, %p187
      %p189 = scmp.ne.s32.totalorder %s175, %s176
      %p190 = scmp.eq.s32.totalorder %s24, 1
      %p191 = por %p189, %p190
      %p193 = scmp.ne.s32.totalorder %s176, %s192
      %p194 = scmp.eq.s32.totalorder %s24, 0
      %p195 = por %p193, %p194
      %p196 = scmp.le.s32.totalorder 1, %s18
      %p197 = scmp.lt.s32.totalorder %s18, 3
      %p198 = pnand %p196, %p197
      %p199 = pneg %p198
      // Predicated region
      $region9: #{tpu_custom_call.1} parent=5 // pred_check
        _
      $region10: #{tpu_custom_call.1} parent=5 // pred_check_branch
        %201 = sbr.rel (%p198) target = $region12
      $region11: #{tpu_custom_call.1} parent=5 // pred_region
        %s202 = ssub.s32 %s18, 1
        // Predicated region
        $region13: #{tpu_custom_call.1} parent=11 // pred_check
          %p203 = pneg %p136
        $region14: #{tpu_custom_call.1} parent=11 // pred_check_branch
          %205 = sbr.rel (%p203) target = $region16
        $region15: #{tpu_custom_call.1} parent=11 // pred_region
          %s206 = smul.u32 10, %s27
          %p207 = scmp.lt.s32.totalorder %s206, 9
          %s208 = scalar_select %p207, %s206, 9
          %s209 = smul.addr %s208, 8
          %s210 = scalar_lea.vmem %s3, %s209
          %s211 = smul.u32 10, %s27
        $region16: #{tpu_custom_call.1} parent=11 // pred_fallthru
          _
        // Predicated region
        $region17: #{tpu_custom_call.1} parent=11 // pred_check
          %p212 = pneg %p162
        $region18: #{tpu_custom_call.1} parent=11 // pred_check_branch
          %214 = sbr.rel (%p212) target = $region20
        $region19: #{tpu_custom_call.1} parent=11 // pred_region
          %s215 = smul.u32 10, %s27
          %p216 = scmp.lt.s32.totalorder %s215, 9
          %s217 = scalar_select %p216, %s215, 9
          %s218 = smul.addr %s217, 8
          %s219 = scalar_lea.vmem %s4, %s218
          %s220 = smul.u32 10, %s27
        $region20: #{tpu_custom_call.1} parent=11 // pred_fallthru
          _
      $region12: #{tpu_custom_call.1} parent=5 // pred_fallthru
        _
      %p221 = scmp.lt.s32.totalorder %s18, 2
      // Predicated region
      $region21: #{tpu_custom_call.1} parent=5 // pred_check
        %p222 = pneg %p221
      $region22: #{tpu_custom_call.1} parent=5 // pred_check_branch
        %224 = sbr.rel (%p222) target = $region24
      $region23: #{tpu_custom_call.1} parent=5 // pred_region
        // Predicated region
        $region25: #{tpu_custom_call.1} parent=23 // pred_check
          %p225 = pneg %p50
        $region26: #{tpu_custom_call.1} parent=23 // pred_check_branch
          %227 = sbr.rel (%p225) target = $region28
        $region27: #{tpu_custom_call.1} parent=23 // pred_region
          %s228 = sand.u32 %s40, 1
          %s229 = scalar_lea.sflag [#allocation3], %s228
          %s230 = sand.u32 %s40, 1
          %s231 = smul.addr %s230, 2
          %s232 = scalar_lea.vmem [#allocation2], %s231
          %s233 = smul.u32 2, %s26
          %s235 = ssub.s32 32, 32
          %236 = vsyncadd %s229, %s235
          %s237 = smul.addr %s233, 16
          %s238 = scalar_lea.hbm %s0, %s237
          %s240 = sshll.u32 %s232, 4
          %s241 = int_to_ptr.vmem [resolvable:$true] %s240
          %243 = dma.hbm_to_vmem [thread:$0]  %s238, 32, %s241, %s229
        $region28: #{tpu_custom_call.1} parent=23 // pred_fallthru
          _
        // Predicated region
        $region29: #{tpu_custom_call.1} parent=23 // pred_check
          %p244 = pneg %p76
        $region30: #{tpu_custom_call.1} parent=23 // pred_check_branch
          %246 = sbr.rel (%p244) target = $region32
        $region31: #{tpu_custom_call.1} parent=23 // pred_region
          %s247 = sand.u32 %s18, 1
          %s248 = scalar_lea.sflag [#allocation6], %s247
          %s249 = sand.u32 %s66, 1
          %s250 = smul.addr %s249, 1792
          %s251 = scalar_lea.vmem [#allocation5], %s250
          %s252 = smul.u32 32, %s26
          %s254 = ssub.s32 28672, 28672
          %255 = vsyncadd %s248, %s254
          %s256 = smul.addr %s252, 7
          %s257 = smul.addr %s256, 128
          %s258 = scalar_lea.hbm %s1, %s257
          %s259 = sshll.u32 %s251, 4
          %s260 = int_to_ptr.vmem [resolvable:$true] %s259
          %265 = dma.hbm_to_vmem [thread:$0]  %s258, 28672, %s260, %s248, 896, 896, 56
        $region32: #{tpu_custom_call.1} parent=23 // pred_fallthru
          _
        // Predicated region
        $region33: #{tpu_custom_call.1} parent=23 // pred_check
          %p266 = pneg %p104
        $region34: #{tpu_custom_call.1} parent=23 // pred_check_branch
          %268 = sbr.rel (%p266) target = $region36
        $region35: #{tpu_custom_call.1} parent=23 // pred_region
          %s269 = sand.u32 %s18, 1
          %s270 = scalar_lea.sflag [#allocation6], %s269
          %s271 = sand.u32 %s94, 1
          %s272 = smul.addr %s271, 160
          %s273 = scalar_lea.vmem [#allocation7], %s272
          %s274 = smul.u32 10, %s25
          %s275 = smul.u32 2, %s26
          %s277 = ssub.s32 2560, 2560
          %278 = vsyncadd %s270, %s277
          %s279 = smul.addr %s274, 4
          %s280 = sadd.s32 %s275, %s279
          %s281 = smul.addr %s280, 128
          %s282 = scalar_lea.hbm %s2, %s281
          %s283 = sshll.u32 %s273, 4
          %s284 = int_to_ptr.vmem [resolvable:$true] %s283
          %289 = dma.hbm_to_vmem [thread:$0]  %s282, 2560, %s284, %s270, 512, 256, 16
        $region36: #{tpu_custom_call.1} parent=23 // pred_fallthru
          _
      $region24: #{tpu_custom_call.1} parent=5 // pred_fallthru
        _
      %p290 = scmp.le.s32.totalorder 1, %s18
      %p291 = scmp.lt.s32.totalorder %s18, 3
      %p292 = pnand %p290, %p291
      %p293 = pneg %p292
      // Predicated region
      $region37: #{tpu_custom_call.1} parent=5 // pred_check
        _
      $region38: #{tpu_custom_call.1} parent=5 // pred_check_branch
        %295 = sbr.rel (%p292) target = $region40
      $region39: #{tpu_custom_call.1} parent=5 // pred_region
        %s296 = ssub.s32 %s18, 1
        %s297 = sand.u32 %s43, 1
        %s298 = scalar_lea.sflag [#allocation3], %s297
        %s299 = sand.u32 %s43, 1
        %s300 = smul.addr %s299, 2
        %s301 = scalar_lea.vmem [#allocation2], %s300
        // Predicated region
        $region41: #{tpu_custom_call.1} parent=39 // pred_check
          %p302 = pneg %p56
        $region42: #{tpu_custom_call.1} parent=39 // pred_check_branch
          %304 = sbr.rel (%p302) target = $region44
        $region43: #{tpu_custom_call.1} parent=39 // pred_region
          %305 = dma.done %s298, 32
        $region44: #{tpu_custom_call.1} parent=39 // pred_fallthru
          _
        %s306 = sand.u32 %s23, 1
        %s307 = scalar_lea.sflag [#allocation6], %s306
        %s308 = sand.u32 %s69, 1
        %s309 = smul.addr %s308, 1792
        %s310 = scalar_lea.vmem [#allocation5], %s309
        // Predicated region
        $region45: #{tpu_custom_call.1} parent=39 // pred_check
          %p311 = pneg %p82
        $region46: #{tpu_custom_call.1} parent=39 // pred_check_branch
          %313 = sbr.rel (%p311) target = $region48
        $region47: #{tpu_custom_call.1} parent=39 // pred_region
          %314 = dma.done %s307, 28672
        $region48: #{tpu_custom_call.1} parent=39 // pred_fallthru
          _
        %s315 = sand.u32 %s23, 1
        %s316 = scalar_lea.sflag [#allocation6], %s315
        %s317 = sand.u32 %s97, 1
        %s318 = smul.addr %s317, 160
        %s319 = scalar_lea.vmem [#allocation7], %s318
        // Predicated region
        $region49: #{tpu_custom_call.1} parent=39 // pred_check
          %p320 = pneg %p110
        $region50: #{tpu_custom_call.1} parent=39 // pred_check_branch
          %322 = sbr.rel (%p320) target = $region52
        $region51: #{tpu_custom_call.1} parent=39 // pred_region
          %323 = dma.done %s316, 2560
        $region52: #{tpu_custom_call.1} parent=39 // pred_fallthru
          _
        %s324 = sand.u32 %s43, 1
        %s325 = scalar_lea.sflag [#allocation3], %s324
        %s326 = sand.u32 %s43, 1
        %s327 = smul.addr %s326, 2
        %s328 = scalar_lea.vmem [#allocation2], %s327
        %p329 = pneg %p56
        %p330 = pneg %p53
        %s331 = sand.u32 %s23, 1
        %s332 = scalar_lea.sflag [#allocation6], %s331
        %s333 = sand.u32 %s69, 1
        %s334 = smul.addr %s333, 1792
        %s335 = scalar_lea.vmem [#allocation5], %s334
        %p336 = pneg %p82
        %p337 = pneg %p79
        %s338 = sand.u32 %s23, 1
        %s339 = scalar_lea.sflag [#allocation6], %s338
        %s340 = sand.u32 %s97, 1
        %s341 = smul.addr %s340, 160
        %s342 = scalar_lea.vmem [#allocation7], %s341
        %p343 = pneg %p110
        %p344 = pneg %p107
        %s345 = smul.u32 10, %s27
        %p346 = scmp.lt.s32.totalorder %s345, 9
        %s347 = scalar_select %p346, %s345, 9
        %s348 = smul.addr %s347, 8
        %s349 = scalar_lea.vmem %s3, %s348
        %p350 = pneg %p136
        %p351 = pneg %p133
        %s352 = smul.u32 10, %s27
        %p353 = scmp.lt.s32.totalorder %s352, 9
        %s354 = scalar_select %p353, %s352, 9
        %s355 = smul.addr %s354, 8
        %s356 = scalar_lea.vmem %s4, %s355
        %p357 = pneg %p162
        %p358 = pneg %p159
        %p359 = pneg %p188
        %p360 = pneg %p185
        %s361 = smul.u32 2, %s28
        %s362 = smul.u32 32, %s28
        %s363 = smul.u32 10, %s27
        %s364 = smul.u32 2, %s28
        %s365 = smul.u32 10, %s27
        %p366 = scmp.lt.s32.totalorder %s365, 9
        %s367 = scalar_select %p366, %s365, 9
        %s368 = smul.addr %s367, 8
        %s369 = scalar_lea.vmem %s3, %s368
        %s370 = smul.u32 10, %s27
        %s371 = smul.u32 10, %s27
        %p372 = scmp.lt.s32.totalorder %s371, 9
        %s373 = scalar_select %p372, %s371, 9
        %s374 = smul.addr %s373, 8
        %s375 = scalar_lea.vmem %s4, %s374
        %s376 = smul.u32 10, %s27
        %s377 = smul.u32 10, %s27
        %v379 = vld [vmem:[%s319] sm:$0xff]
        %v380 = vld [vmem:[%s319 + $0x8] sm:$0xff]
        %v381 = vld [vmem:[%s319 + $0x10] sm:$0xff]
        %v382 = vld [vmem:[%s319 + $0x18] sm:$0xff]
        %v383 = vld [vmem:[%s319 + $0x20] sm:$0xff]
        %v384 = vld [vmem:[%s319 + $0x28] sm:$0xff]
        %v385 = vld [vmem:[%s319 + $0x30] sm:$0xff]
        %v386 = vld [vmem:[%s319 + $0x38] sm:$0xff]
        %v387 = vld [vmem:[%s319 + $0x40] sm:$0xff]
        %v388 = vld [vmem:[%s319 + $0x48] sm:$0xff]
        %v389 = vld [vmem:[%s319 + $0x50] sm:$0xff]
        %v390 = vld [vmem:[%s319 + $0x58] sm:$0xff]
        %v391 = vld [vmem:[%s319 + $0x60] sm:$0xff]
        %v392 = vld [vmem:[%s319 + $0x68] sm:$0xff]
        %v393 = vld [vmem:[%s319 + $0x70] sm:$0xff]
        %v394 = vld [vmem:[%s319 + $0x78] sm:$0xff]
        %v395 = vld [vmem:[%s319 + $0x80] sm:$0xff]
        %v396 = vld [vmem:[%s319 + $0x88] sm:$0xff]
        %v397 = vld [vmem:[%s319 + $0x90] sm:$0xff]
        %v398 = vld [vmem:[%s319 + $0x98] sm:$0xff]
        %v399 = vld [vmem:[%s301] sm:$0x3]
        %v400 = vxor.u32 %v399, 2147483648
        %v401 = vmul.f32 %v400, 1.442695
        %v402 = vpow.pop %v401
        %v403 = vadd.f32 %v402, 1.0
        %v404 = vrcp.pop %v403
        %v405 = vmul.f32 1.0, %v404
        %v407 = vlaneseq
        %v408 = vshrl.u32 %v407, 7
        %v409 = vsub.s32 0, %v408
        %v410 = vrot.slane %v405, %v409
        %v411 = vlaneseq
        %v412 = vshrl.u32 %v411, 7
        %v413 = vsub.s32 1, %v412
        %v414 = vrot.slane %v405, %v413
        %v417 = vmul.f32 %v379, %v410
        %v418 = vmul.f32 %v380, %v414
        %v419 = vmul.f32 %v381, %v410
        %v420 = vmul.f32 %v382, %v414
        %v421 = vmul.f32 %v383, %v410
        %v422 = vmul.f32 %v384, %v414
        %v423 = vmul.f32 %v385, %v410
        %v424 = vmul.f32 %v386, %v414
        %v425 = vmul.f32 %v387, %v410
        %v426 = vmul.f32 %v388, %v414
        %v427 = vmul.f32 %v389, %v410
        %v428 = vmul.f32 %v390, %v414
        %v429 = vmul.f32 %v391, %v410
        %v430 = vmul.f32 %v392, %v414
        %v431 = vmul.f32 %v393, %v410
        %v432 = vmul.f32 %v394, %v414
        %v433 = vmul.f32 %v395, %v410
        %v434 = vmul.f32 %v396, %v414
        %v435 = vmul.f32 %v397, %v410
        %v436 = vmul.f32 %v398, %v414
        %v437 = vpack.c.bf16 %v419, %v417
        %v438 = vpack.c.bf16 %v420, %v418
        %v439 = vpack.c.bf16 %v423, %v421
        %v440 = vpack.c.bf16 %v424, %v422
        %v441 = vpack.c.bf16 %v427, %v425
        %v442 = vpack.c.bf16 %v428, %v426
        %v443 = vpack.c.bf16 %v431, %v429
        %v444 = vpack.c.bf16 %v432, %v430
        %v445 = vpack.c.bf16 %v435, %v433
        %v446 = vpack.c.bf16 %v436, %v434
        %v447 = vld [vmem:[%s310] sm:$0xff]
        %v448 = vld [vmem:[%s310 + $0x8] sm:$0xff]
        %v449 = vld [vmem:[%s310 + $0x10] sm:$0xff]
        %v450 = vld [vmem:[%s310 + $0x18] sm:$0xff]
        %v451 = vld [vmem:[%s310 + $0x20] sm:$0xff]
        %v452 = vld [vmem:[%s310 + $0x28] sm:$0xff]
        %v453 = vld [vmem:[%s310 + $0x30] sm:$0xff]
        %v454 = vld [vmem:[%s310 + $0x38] sm:$0xff]
        %v455 = vld [vmem:[%s310 + $0x40] sm:$0xff]
        %v456 = vld [vmem:[%s310 + $0x48] sm:$0xff]
        %v457 = vld [vmem:[%s310 + $0x50] sm:$0xff]
        %v458 = vld [vmem:[%s310 + $0x58] sm:$0xff]
        %v459 = vld [vmem:[%s310 + $0x60] sm:$0xff]
        %v460 = vld [vmem:[%s310 + $0x68] sm:$0xff]
        %v461 = vld [vmem:[%s310 + $0x70] sm:$0xff]
        %v462 = vld [vmem:[%s310 + $0x78] sm:$0xff]
        %v463 = vld [vmem:[%s310 + $0x80] sm:$0xff]
        %v464 = vld [vmem:[%s310 + $0x88] sm:$0xff]
        %v465 = vld [vmem:[%s310 + $0x90] sm:$0xff]
        %v466 = vld [vmem:[%s310 + $0x98] sm:$0xff]
        %v467 = vld [vmem:[%s310 + $0xa0] sm:$0xff]
        %v468 = vld [vmem:[%s310 + $0xa8] sm:$0xff]
        %v469 = vld [vmem:[%s310 + $0xb0] sm:$0xff]
        %v470 = vld [vmem:[%s310 + $0xb8] sm:$0xff]
        %v471 = vld [vmem:[%s310 + $0xc0] sm:$0xff]
        %v472 = vld [vmem:[%s310 + $0xc8] sm:$0xff]
        %v473 = vld [vmem:[%s310 + $0xd0] sm:$0xff]
        %v474 = vld [vmem:[%s310 + $0xd8] sm:$0xff]
        %v475 = vld [vmem:[%s310 + $0xe0] sm:$0xff]
        %v476 = vld [vmem:[%s310 + $0xe8] sm:$0xff]
        %v477 = vld [vmem:[%s310 + $0xf0] sm:$0xff]
        %v478 = vld [vmem:[%s310 + $0xf8] sm:$0xff]
        %v479 = vld [vmem:[%s310 + $0x100] sm:$0xff]
        %v480 = vld [vmem:[%s310 + $0x108] sm:$0xff]
        %v481 = vld [vmem:[%s310 + $0x110] sm:$0xff]
        %v482 = vld [vmem:[%s310 + $0x118] sm:$0xff]
        %v483 = vld [vmem:[%s310 + $0x120] sm:$0xff]
        %v484 = vld [vmem:[%s310 + $0x128] sm:$0xff]
        %v485 = vld [vmem:[%s310 + $0x130] sm:$0xff]
        %v486 = vld [vmem:[%s310 + $0x138] sm:$0xff]
        %v487 = vld [vmem:[%s310 + $0x140] sm:$0xff]
        %v488 = vld [vmem:[%s310 + $0x148] sm:$0xff]
        %v489 = vld [vmem:[%s310 + $0x150] sm:$0xff]
        %v490 = vld [vmem:[%s310 + $0x158] sm:$0xff]
        %v491 = vld [vmem:[%s310 + $0x160] sm:$0xff]
        %v492 = vld [vmem:[%s310 + $0x168] sm:$0xff]
        %v493 = vld [vmem:[%s310 + $0x170] sm:$0xff]
        %v494 = vld [vmem:[%s310 + $0x178] sm:$0xff]
        %v495 = vld [vmem:[%s310 + $0x180] sm:$0xff]
        %v496 = vld [vmem:[%s310 + $0x188] sm:$0xff]
        %v497 = vld [vmem:[%s310 + $0x190] sm:$0xff]
        %v498 = vld [vmem:[%s310 + $0x198] sm:$0xff]
        %v499 = vld [vmem:[%s310 + $0x1a0] sm:$0xff]
        %v500 = vld [vmem:[%s310 + $0x1a8] sm:$0xff]
        %v501 = vld [vmem:[%s310 + $0x1b0] sm:$0xff]
        %v502 = vld [vmem:[%s310 + $0x1b8] sm:$0xff]
        %v503 = vld [vmem:[%s310 + $0x1c0] sm:$0xff]
        %v504 = vld [vmem:[%s310 + $0x1c8] sm:$0xff]
        %v505 = vld [vmem:[%s310 + $0x1d0] sm:$0xff]
        %v506 = vld [vmem:[%s310 + $0x1d8] sm:$0xff]
        %v507 = vld [vmem:[%s310 + $0x1e0] sm:$0xff]
        %v508 = vld [vmem:[%s310 + $0x1e8] sm:$0xff]
        %v509 = vld [vmem:[%s310 + $0x1f0] sm:$0xff]
        %v510 = vld [vmem:[%s310 + $0x1f8] sm:$0xff]
        %v511 = vld [vmem:[%s310 + $0x200] sm:$0xff]
        %v512 = vld [vmem:[%s310 + $0x208] sm:$0xff]
        %v513 = vld [vmem:[%s310 + $0x210] sm:$0xff]
        %v514 = vld [vmem:[%s310 + $0x218] sm:$0xff]
        %v515 = vld [vmem:[%s310 + $0x220] sm:$0xff]
        %v516 = vld [vmem:[%s310 + $0x228] sm:$0xff]
        %v517 = vld [vmem:[%s310 + $0x230] sm:$0xff]
        %v518 = vld [vmem:[%s310 + $0x238] sm:$0xff]
        %v519 = vld [vmem:[%s310 + $0x240] sm:$0xff]
        %v520 = vld [vmem:[%s310 + $0x248] sm:$0xff]
        %v521 = vld [vmem:[%s310 + $0x250] sm:$0xff]
        %v522 = vld [vmem:[%s310 + $0x258] sm:$0xff]
        %v523 = vld [vmem:[%s310 + $0x260] sm:$0xff]
        %v524 = vld [vmem:[%s310 + $0x268] sm:$0xff]
        %v525 = vld [vmem:[%s310 + $0x270] sm:$0xff]
        %v526 = vld [vmem:[%s310 + $0x278] sm:$0xff]
        %v527 = vld [vmem:[%s310 + $0x280] sm:$0xff]
        %v528 = vld [vmem:[%s310 + $0x288] sm:$0xff]
        %v529 = vld [vmem:[%s310 + $0x290] sm:$0xff]
        %v530 = vld [vmem:[%s310 + $0x298] sm:$0xff]
        %v531 = vld [vmem:[%s310 + $0x2a0] sm:$0xff]
        %v532 = vld [vmem:[%s310 + $0x2a8] sm:$0xff]
        %v533 = vld [vmem:[%s310 + $0x2b0] sm:$0xff]
        %v534 = vld [vmem:[%s310 + $0x2b8] sm:$0xff]
        %v535 = vld [vmem:[%s310 + $0x2c0] sm:$0xff]
        %v536 = vld [vmem:[%s310 + $0x2c8] sm:$0xff]
        %v537 = vld [vmem:[%s310 + $0x2d0] sm:$0xff]
        %v538 = vld [vmem:[%s310 + $0x2d8] sm:$0xff]
        %v539 = vld [vmem:[%s310 + $0x2e0] sm:$0xff]
        %v540 = vld [vmem:[%s310 + $0x2e8] sm:$0xff]
        %v541 = vld [vmem:[%s310 + $0x2f0] sm:$0xff]
        %v542 = vld [vmem:[%s310 + $0x2f8] sm:$0xff]
        %v543 = vld [vmem:[%s310 + $0x300] sm:$0xff]
        %v544 = vld [vmem:[%s310 + $0x308] sm:$0xff]
        %v545 = vld [vmem:[%s310 + $0x310] sm:$0xff]
        %v546 = vld [vmem:[%s310 + $0x318] sm:$0xff]
        %v547 = vld [vmem:[%s310 + $0x320] sm:$0xff]
        %v548 = vld [vmem:[%s310 + $0x328] sm:$0xff]
        %v549 = vld [vmem:[%s310 + $0x330] sm:$0xff]
        %v550 = vld [vmem:[%s310 + $0x338] sm:$0xff]
        %v551 = vld [vmem:[%s310 + $0x340] sm:$0xff]
        %v552 = vld [vmem:[%s310 + $0x348] sm:$0xff]
        %v553 = vld [vmem:[%s310 + $0x350] sm:$0xff]
        %v554 = vld [vmem:[%s310 + $0x358] sm:$0xff]
        %v555 = vld [vmem:[%s310 + $0x360] sm:$0xff]
        %v556 = vld [vmem:[%s310 + $0x368] sm:$0xff]
        %v557 = vld [vmem:[%s310 + $0x370] sm:$0xff]
        %v558 = vld [vmem:[%s310 + $0x378] sm:$0xff]
        %v559 = vld [vmem:[%s310 + $0x380] sm:$0xff]
        %v560 = vld [vmem:[%s310 + $0x388] sm:$0xff]
        %v561 = vld [vmem:[%s310 + $0x390] sm:$0xff]
        %v562 = vld [vmem:[%s310 + $0x398] sm:$0xff]
        %v563 = vld [vmem:[%s310 + $0x3a0] sm:$0xff]
        %v564 = vld [vmem:[%s310 + $0x3a8] sm:$0xff]
        %v565 = vld [vmem:[%s310 + $0x3b0] sm:$0xff]
        %v566 = vld [vmem:[%s310 + $0x3b8] sm:$0xff]
        %v567 = vld [vmem:[%s310 + $0x3c0] sm:$0xff]
        %v568 = vld [vmem:[%s310 + $0x3c8] sm:$0xff]
        %v569 = vld [vmem:[%s310 + $0x3d0] sm:$0xff]
        %v570 = vld [vmem:[%s310 + $0x3d8] sm:$0xff]
        %v571 = vld [vmem:[%s310 + $0x3e0] sm:$0xff]
        %v572 = vld [vmem:[%s310 + $0x3e8] sm:$0xff]
        %v573 = vld [vmem:[%s310 + $0x3f0] sm:$0xff]
        %v574 = vld [vmem:[%s310 + $0x3f8] sm:$0xff]
        %v575 = vld [vmem:[%s310 + $0x400] sm:$0xff]
        %v576 = vld [vmem:[%s310 + $0x408] sm:$0xff]
        %v577 = vld [vmem:[%s310 + $0x410] sm:$0xff]
        %v578 = vld [vmem:[%s310 + $0x418] sm:$0xff]
        %v579 = vld [vmem:[%s310 + $0x420] sm:$0xff]
        %v580 = vld [vmem:[%s310 + $0x428] sm:$0xff]
        %v581 = vld [vmem:[%s310 + $0x430] sm:$0xff]
        %v582 = vld [vmem:[%s310 + $0x438] sm:$0xff]
        %v583 = vld [vmem:[%s310 + $0x440] sm:$0xff]
        %v584 = vld [vmem:[%s310 + $0x448] sm:$0xff]
        %v585 = vld [vmem:[%s310 + $0x450] sm:$0xff]
        %v586 = vld [vmem:[%s310 + $0x458] sm:$0xff]
        %v587 = vld [vmem:[%s310 + $0x460] sm:$0xff]
        %v588 = vld [vmem:[%s310 + $0x468] sm:$0xff]
        %v589 = vld [vmem:[%s310 + $0x470] sm:$0xff]
        %v590 = vld [vmem:[%s310 + $0x478] sm:$0xff]
        %v591 = vld [vmem:[%s310 + $0x480] sm:$0xff]
        %v592 = vld [vmem:[%s310 + $0x488] sm:$0xff]
        %v593 = vld [vmem:[%s310 + $0x490] sm:$0xff]
        %v594 = vld [vmem:[%s310 + $0x498] sm:$0xff]
        %v595 = vld [vmem:[%s310 + $0x4a0] sm:$0xff]
        %v596 = vld [vmem:[%s310 + $0x4a8] sm:$0xff]
        %v597 = vld [vmem:[%s310 + $0x4b0] sm:$0xff]
        %v598 = vld [vmem:[%s310 + $0x4b8] sm:$0xff]
        %v599 = vld [vmem:[%s310 + $0x4c0] sm:$0xff]
        %v600 = vld [vmem:[%s310 + $0x4c8] sm:$0xff]
        %v601 = vld [vmem:[%s310 + $0x4d0] sm:$0xff]
        %v602 = vld [vmem:[%s310 + $0x4d8] sm:$0xff]
        %v603 = vld [vmem:[%s310 + $0x4e0] sm:$0xff]
        %v604 = vld [vmem:[%s310 + $0x4e8] sm:$0xff]
        %v605 = vld [vmem:[%s310 + $0x4f0] sm:$0xff]
        %v606 = vld [vmem:[%s310 + $0x4f8] sm:$0xff]
        %v607 = vld [vmem:[%s310 + $0x500] sm:$0xff]
        %v608 = vld [vmem:[%s310 + $0x508] sm:$0xff]
        %v609 = vld [vmem:[%s310 + $0x510] sm:$0xff]
        %v610 = vld [vmem:[%s310 + $0x518] sm:$0xff]
        %v611 = vld [vmem:[%s310 + $0x520] sm:$0xff]
        %v612 = vld [vmem:[%s310 + $0x528] sm:$0xff]
        %v613 = vld [vmem:[%s310 + $0x530] sm:$0xff]
        %v614 = vld [vmem:[%s310 + $0x538] sm:$0xff]
        %v615 = vld [vmem:[%s310 + $0x540] sm:$0xff]
        %v616 = vld [vmem:[%s310 + $0x548] sm:$0xff]
        %v617 = vld [vmem:[%s310 + $0x550] sm:$0xff]
        %v618 = vld [vmem:[%s310 + $0x558] sm:$0xff]
        %v619 = vld [vmem:[%s310 + $0x560] sm:$0xff]
        %v620 = vld [vmem:[%s310 + $0x568] sm:$0xff]
        %v621 = vld [vmem:[%s310 + $0x570] sm:$0xff]
        %v622 = vld [vmem:[%s310 + $0x578] sm:$0xff]
        %v623 = vld [vmem:[%s310 + $0x580] sm:$0xff]
        %v624 = vld [vmem:[%s310 + $0x588] sm:$0xff]
        %v625 = vld [vmem:[%s310 + $0x590] sm:$0xff]
        %v626 = vld [vmem:[%s310 + $0x598] sm:$0xff]
        %v627 = vld [vmem:[%s310 + $0x5a0] sm:$0xff]
        %v628 = vld [vmem:[%s310 + $0x5a8] sm:$0xff]
        %v629 = vld [vmem:[%s310 + $0x5b0] sm:$0xff]
        %v630 = vld [vmem:[%s310 + $0x5b8] sm:$0xff]
        %v631 = vld [vmem:[%s310 + $0x5c0] sm:$0xff]
        %v632 = vld [vmem:[%s310 + $0x5c8] sm:$0xff]
        %v633 = vld [vmem:[%s310 + $0x5d0] sm:$0xff]
        %v634 = vld [vmem:[%s310 + $0x5d8] sm:$0xff]
        %v635 = vld [vmem:[%s310 + $0x5e0] sm:$0xff]
        %v636 = vld [vmem:[%s310 + $0x5e8] sm:$0xff]
        %v637 = vld [vmem:[%s310 + $0x5f0] sm:$0xff]
        %v638 = vld [vmem:[%s310 + $0x5f8] sm:$0xff]
        %v639 = vld [vmem:[%s310 + $0x600] sm:$0xff]
        %v640 = vld [vmem:[%s310 + $0x608] sm:$0xff]
        %v641 = vld [vmem:[%s310 + $0x610] sm:$0xff]
        %v642 = vld [vmem:[%s310 + $0x618] sm:$0xff]
        %v643 = vld [vmem:[%s310 + $0x620] sm:$0xff]
        %v644 = vld [vmem:[%s310 + $0x628] sm:$0xff]
        %v645 = vld [vmem:[%s310 + $0x630] sm:$0xff]
        %v646 = vld [vmem:[%s310 + $0x638] sm:$0xff]
        %v647 = vld [vmem:[%s310 + $0x640] sm:$0xff]
        %v648 = vld [vmem:[%s310 + $0x648] sm:$0xff]
        %v649 = vld [vmem:[%s310 + $0x650] sm:$0xff]
        %v650 = vld [vmem:[%s310 + $0x658] sm:$0xff]
        %v651 = vld [vmem:[%s310 + $0x660] sm:$0xff]
        %v652 = vld [vmem:[%s310 + $0x668] sm:$0xff]
        %v653 = vld [vmem:[%s310 + $0x670] sm:$0xff]
        %v654 = vld [vmem:[%s310 + $0x678] sm:$0xff]
        %v655 = vld [vmem:[%s310 + $0x680] sm:$0xff]
        %v656 = vld [vmem:[%s310 + $0x688] sm:$0xff]
        %v657 = vld [vmem:[%s310 + $0x690] sm:$0xff]
        %v658 = vld [vmem:[%s310 + $0x698] sm:$0xff]
        %v659 = vld [vmem:[%s310 + $0x6a0] sm:$0xff]
        %v660 = vld [vmem:[%s310 + $0x6a8] sm:$0xff]
        %v661 = vld [vmem:[%s310 + $0x6b0] sm:$0xff]
        %v662 = vld [vmem:[%s310 + $0x6b8] sm:$0xff]
        %v663 = vld [vmem:[%s310 + $0x6c0] sm:$0xff]
        %v664 = vld [vmem:[%s310 + $0x6c8] sm:$0xff]
        %v665 = vld [vmem:[%s310 + $0x6d0] sm:$0xff]
        %v666 = vld [vmem:[%s310 + $0x6d8] sm:$0xff]
        %v667 = vld [vmem:[%s310 + $0x6e0] sm:$0xff]
        %v668 = vld [vmem:[%s310 + $0x6e8] sm:$0xff]
        %v669 = vld [vmem:[%s310 + $0x6f0] sm:$0xff]
        %v670 = vld [vmem:[%s310 + $0x6f8] sm:$0xff]
        %v671 = vpack.c.bf16 %v454, %v447
        %v672 = vpack.c.bf16 %v455, %v448
        %v673 = vpack.c.bf16 %v456, %v449
        %v674 = vpack.c.bf16 %v457, %v450
        %v675 = vpack.c.bf16 %v458, %v451
        %v676 = vpack.c.bf16 %v459, %v452
        %v677 = vpack.c.bf16 %v460, %v453
        %v678 = vpack.c.bf16 %v468, %v461
        %v679 = vpack.c.bf16 %v469, %v462
        %v680 = vpack.c.bf16 %v470, %v463
        %v681 = vpack.c.bf16 %v471, %v464
        %v682 = vpack.c.bf16 %v472, %v465
        %v683 = vpack.c.bf16 %v473, %v466
        %v684 = vpack.c.bf16 %v474, %v467
        %v685 = vpack.c.bf16 %v482, %v475
        %v686 = vpack.c.bf16 %v483, %v476
        %v687 = vpack.c.bf16 %v484, %v477
        %v688 = vpack.c.bf16 %v485, %v478
        %v689 = vpack.c.bf16 %v486, %v479
        %v690 = vpack.c.bf16 %v487, %v480
        %v691 = vpack.c.bf16 %v488, %v481
        %v692 = vpack.c.bf16 %v496, %v489
        %v693 = vpack.c.bf16 %v497, %v490
        %v694 = vpack.c.bf16 %v498, %v491
        %v695 = vpack.c.bf16 %v499, %v492
        %v696 = vpack.c.bf16 %v500, %v493
        %v697 = vpack.c.bf16 %v501, %v494
        %v698 = vpack.c.bf16 %v502, %v495
        %v699 = vpack.c.bf16 %v510, %v503
        %v700 = vpack.c.bf16 %v511, %v504
        %v701 = vpack.c.bf16 %v512, %v505
        %v702 = vpack.c.bf16 %v513, %v506
        %v703 = vpack.c.bf16 %v514, %v507
        %v704 = vpack.c.bf16 %v515, %v508
        %v705 = vpack.c.bf16 %v516, %v509
        %v706 = vpack.c.bf16 %v524, %v517
        %v707 = vpack.c.bf16 %v525, %v518
        %v708 = vpack.c.bf16 %v526, %v519
        %v709 = vpack.c.bf16 %v527, %v520
        %v710 = vpack.c.bf16 %v528, %v521
        %v711 = vpack.c.bf16 %v529, %v522
        %v712 = vpack.c.bf16 %v530, %v523
        %v713 = vpack.c.bf16 %v538, %v531
        %v714 = vpack.c.bf16 %v539, %v532
        %v715 = vpack.c.bf16 %v540, %v533
        %v716 = vpack.c.bf16 %v541, %v534
        %v717 = vpack.c.bf16 %v542, %v535
        %v718 = vpack.c.bf16 %v543, %v536
        %v719 = vpack.c.bf16 %v544, %v537
        %v720 = vpack.c.bf16 %v552, %v545
        %v721 = vpack.c.bf16 %v553, %v546
        %v722 = vpack.c.bf16 %v554, %v547
        %v723 = vpack.c.bf16 %v555, %v548
        %v724 = vpack.c.bf16 %v556, %v549
        %v725 = vpack.c.bf16 %v557, %v550
        %v726 = vpack.c.bf16 %v558, %v551
        %v727 = vpack.c.bf16 %v566, %v559
        %v728 = vpack.c.bf16 %v567, %v560
        %v729 = vpack.c.bf16 %v568, %v561
        %v730 = vpack.c.bf16 %v569, %v562
        %v731 = vpack.c.bf16 %v570, %v563
        %v732 = vpack.c.bf16 %v571, %v564
        %v733 = vpack.c.bf16 %v572, %v565
        %v734 = vpack.c.bf16 %v580, %v573
        %v735 = vpack.c.bf16 %v581, %v574
        %v736 = vpack.c.bf16 %v582, %v575
        %v737 = vpack.c.bf16 %v583, %v576
        %v738 = vpack.c.bf16 %v584, %v577
        %v739 = vpack.c.bf16 %v585, %v578
        %v740 = vpack.c.bf16 %v586, %v579
        %v741 = vpack.c.bf16 %v594, %v587
        %v742 = vpack.c.bf16 %v595, %v588
        %v743 = vpack.c.bf16 %v596, %v589
        %v744 = vpack.c.bf16 %v597, %v590
        %v745 = vpack.c.bf16 %v598, %v591
        %v746 = vpack.c.bf16 %v599, %v592
        %v747 = vpack.c.bf16 %v600, %v593
        %v748 = vpack.c.bf16 %v608, %v601
        %v749 = vpack.c.bf16 %v609, %v602
        %v750 = vpack.c.bf16 %v610, %v603
        %v751 = vpack.c.bf16 %v611, %v604
        %v752 = vpack.c.bf16 %v612, %v605
        %v753 = vpack.c.bf16 %v613, %v606
        %v754 = vpack.c.bf16 %v614, %v607
        %v755 = vpack.c.bf16 %v622, %v615
        %v756 = vpack.c.bf16 %v623, %v616
        %v757 = vpack.c.bf16 %v624, %v617
        %v758 = vpack.c.bf16 %v625, %v618
        %v759 = vpack.c.bf16 %v626, %v619
        %v760 = vpack.c.bf16 %v627, %v620
        %v761 = vpack.c.bf16 %v628, %v621
        %v762 = vpack.c.bf16 %v636, %v629
        %v763 = vpack.c.bf16 %v637, %v630
        %v764 = vpack.c.bf16 %v638, %v631
        %v765 = vpack.c.bf16 %v639, %v632
        %v766 = vpack.c.bf16 %v640, %v633
        %v767 = vpack.c.bf16 %v641, %v634
        %v768 = vpack.c.bf16 %v642, %v635
        %v769 = vpack.c.bf16 %v650, %v643
        %v770 = vpack.c.bf16 %v651, %v644
        %v771 = vpack.c.bf16 %v652, %v645
        %v772 = vpack.c.bf16 %v653, %v646
        %v773 = vpack.c.bf16 %v654, %v647
        %v774 = vpack.c.bf16 %v655, %v648
        %v775 = vpack.c.bf16 %v656, %v649
        %v776 = vpack.c.bf16 %v664, %v657
        %v777 = vpack.c.bf16 %v665, %v658
        %v778 = vpack.c.bf16 %v666, %v659
        %v779 = vpack.c.bf16 %v667, %v660
        %v780 = vpack.c.bf16 %v668, %v661
        %v781 = vpack.c.bf16 %v669, %v662
        %v782 = vpack.c.bf16 %v670, %v663
        %783 = vmatprep.subr.bf16.mxu0 %v721
        %784 = vmatpush1.bf16.msra.mxu0 %v720
        %785 = vmatprep.subr.bf16.mxu0 %v714
        %786 = vmatpush1.bf16.msra.mxu0 %v713
        %787 = vmatprep.subr.bf16.mxu0 %v707
        %788 = vmatpush1.bf16.msra.mxu0 %v706
        %789 = vmatprep.subr.bf16.mxu0 %v700
        %790 = vmatpush1.bf16.msra.mxu0 %v699
        %791 = vmatprep.subr.bf16.mxu0 %v693
        %792 = vmatpush1.bf16.msra.mxu0 %v692
        %793 = vmatprep.subr.bf16.mxu0 %v686
        %794 = vmatpush1.bf16.msra.mxu0 %v685
        %795 = vmatprep.subr.bf16.mxu0 %v679
        %796 = vmatpush1.bf16.msra.mxu0 %v678
        %797 = vmatprep.subr.bf16.mxu0 %v672
        %798 = vmatpush1.bf16.msra.mxu0 %v671
        %799 = vmatprep.subr.bf16.mxu0 %v777
        %800 = vmatpush2.bf16.msra.mxu0 %v776
        %801 = vmatprep.subr.bf16.mxu0 %v770
        %802 = vmatpush2.bf16.msra.mxu0 %v769
        %803 = vmatprep.subr.bf16.mxu0 %v763
        %804 = vmatpush2.bf16.msra.mxu0 %v762
        %805 = vmatprep.subr.bf16.mxu0 %v756
        %806 = vmatpush2.bf16.msra.mxu0 %v755
        %807 = vmatprep.subr.bf16.mxu0 %v749
        %808 = vmatpush2.bf16.msra.mxu0 %v748
        %809 = vmatprep.subr.bf16.mxu0 %v742
        %810 = vmatpush2.bf16.msra.mxu0 %v741
        %811 = vmatprep.subr.bf16.mxu0 %v735
        %812 = vmatpush2.bf16.msra.mxu0 %v734
        %813 = vmatprep.subr.bf16.mxu0 %v728
        %814 = vmatpush2.bf16.msra.mxu0 %v727
        %815 = vmatprep.mubr.bf16.mxu0 %v438
        %816 = vmatmul.mubr.bf16.gmra.mxu0 %v437
        %v817 = vpop.f32.mrf.mxu0
        %v818 = vadd.f32 0.0, %v817
        %v819 = vpop.f32.mrf.mxu0
        %v820 = vadd.f32 0.0, %v819
        %v821 = vpop.f32.mrf.mxu0
        %v822 = vadd.f32 0.0, %v821
        %v823 = vpop.f32.mrf.mxu0
        %v824 = vadd.f32 0.0, %v823
        %825 = vmatprep.mubr.bf16.mxu0 %v440
        %826 = vmatmul.mubr.bf16.gmra.mxu0 %v439
        %v827 = vpop.f32.mrf.mxu0
        %v828 = vadd.f32 0.0, %v827
        %v829 = vpop.f32.mrf.mxu0
        %v830 = vadd.f32 0.0, %v829
        %v831 = vpop.f32.mrf.mxu0
        %v832 = vadd.f32 0.0, %v831
        %v833 = vpop.f32.mrf.mxu0
        %v834 = vadd.f32 0.0, %v833
        %835 = vmatprep.mubr.bf16.mxu0 %v442
        %836 = vmatmul.mubr.bf16.gmra.mxu0 %v441
        %v837 = vpop.f32.mrf.mxu0
        %v838 = vadd.f32 0.0, %v837
        %v839 = vpop.f32.mrf.mxu0
        %v840 = vadd.f32 0.0, %v839
        %v841 = vpop.f32.mrf.mxu0
        %v842 = vadd.f32 0.0, %v841
        %v843 = vpop.f32.mrf.mxu0
        %v844 = vadd.f32 0.0, %v843
        %845 = vmatprep.mubr.bf16.mxu0 %v444
        %846 = vmatmul.mubr.bf16.gmra.mxu0 %v443
        %v847 = vpop.f32.mrf.mxu0
        %v848 = vadd.f32 0.0, %v847
        %v849 = vpop.f32.mrf.mxu0
        %v850 = vadd.f32 0.0, %v849
        %v851 = vpop.f32.mrf.mxu0
        %v852 = vadd.f32 0.0, %v851
        %v853 = vpop.f32.mrf.mxu0
        %v854 = vadd.f32 0.0, %v853
        %855 = vmatprep.mubr.bf16.mxu0 %v446
        %856 = vmatmul.mubr.bf16.gmra.mxu0 %v445
        %v857 = vpop.f32.mrf.mxu0
        %v858 = vadd.f32 0.0, %v857
        %v859 = vpop.f32.mrf.mxu0
        %v860 = vadd.f32 0.0, %v859
        %v861 = vpop.f32.mrf.mxu0
        %v862 = vadd.f32 0.0, %v861
        %v863 = vpop.f32.mrf.mxu0
        %v864 = vadd.f32 0.0, %v863
        %865 = vdwg.mxu0
        %866 = vmatprep.subr.bf16.mxu0 %v723
        %867 = vmatpush1.bf16.msra.mxu0 %v722
        %868 = vmatprep.subr.bf16.mxu0 %v716
        %869 = vmatpush1.bf16.msra.mxu0 %v715
        %870 = vmatprep.subr.bf16.mxu0 %v709
        %871 = vmatpush1.bf16.msra.mxu0 %v708
        %872 = vmatprep.subr.bf16.mxu0 %v702
        %873 = vmatpush1.bf16.msra.mxu0 %v701
        %874 = vmatprep.subr.bf16.mxu0 %v695
        %875 = vmatpush1.bf16.msra.mxu0 %v694
        %876 = vmatprep.subr.bf16.mxu0 %v688
        %877 = vmatpush1.bf16.msra.mxu0 %v687
        %878 = vmatprep.subr.bf16.mxu0 %v681
        %879 = vmatpush1.bf16.msra.mxu0 %v680
        %880 = vmatprep.subr.bf16.mxu0 %v674
        %881 = vmatpush1.bf16.msra.mxu0 %v673
        %882 = vmatprep.subr.bf16.mxu0 %v779
        %883 = vmatpush2.bf16.msra.mxu0 %v778
        %884 = vmatprep.subr.bf16.mxu0 %v772
        %885 = vmatpush2.bf16.msra.mxu0 %v771
        %886 = vmatprep.subr.bf16.mxu0 %v765
        %887 = vmatpush2.bf16.msra.mxu0 %v764
        %888 = vmatprep.subr.bf16.mxu0 %v758
        %889 = vmatpush2.bf16.msra.mxu0 %v757
        %890 = vmatprep.subr.bf16.mxu0 %v751
        %891 = vmatpush2.bf16.msra.mxu0 %v750
        %892 = vmatprep.subr.bf16.mxu0 %v744
        %893 = vmatpush2.bf16.msra.mxu0 %v743
        %894 = vmatprep.subr.bf16.mxu0 %v737
        %895 = vmatpush2.bf16.msra.mxu0 %v736
        %896 = vmatprep.subr.bf16.mxu0 %v730
        %897 = vmatpush2.bf16.msra.mxu0 %v729
        %898 = vmatprep.mubr.bf16.mxu0 %v438
        %899 = vmatmul.mubr.bf16.gmra.mxu0 %v437
        %v900 = vpop.f32.mrf.mxu0
        %v901 = vadd.f32 0.0, %v900
        %v902 = vpop.f32.mrf.mxu0
        %v903 = vadd.f32 0.0, %v902
        %v904 = vpop.f32.mrf.mxu0
        %v905 = vadd.f32 0.0, %v904
        %v906 = vpop.f32.mrf.mxu0
        %v907 = vadd.f32 0.0, %v906
        %908 = vmatprep.mubr.bf16.mxu0 %v440
        %909 = vmatmul.mubr.bf16.gmra.mxu0 %v439
        %v910 = vpop.f32.mrf.mxu0
        %v911 = vadd.f32 0.0, %v910
        %v912 = vpop.f32.mrf.mxu0
        %v913 = vadd.f32 0.0, %v912
        %v914 = vpop.f32.mrf.mxu0
        %v915 = vadd.f32 0.0, %v914
        %v916 = vpop.f32.mrf.mxu0
        %v917 = vadd.f32 0.0, %v916
        %918 = vmatprep.mubr.bf16.mxu0 %v442
        %919 = vmatmul.mubr.bf16.gmra.mxu0 %v441
        %v920 = vpop.f32.mrf.mxu0
        %v921 = vadd.f32 0.0, %v920
        %v922 = vpop.f32.mrf.mxu0
        %v923 = vadd.f32 0.0, %v922
        %v924 = vpop.f32.mrf.mxu0
        %v925 = vadd.f32 0.0, %v924
        %v926 = vpop.f32.mrf.mxu0
        %v927 = vadd.f32 0.0, %v926
        %928 = vmatprep.mubr.bf16.mxu0 %v444
        %929 = vmatmul.mubr.bf16.gmra.mxu0 %v443
        %v930 = vpop.f32.mrf.mxu0
        %v931 = vadd.f32 0.0, %v930
        %v932 = vpop.f32.mrf.mxu0
        %v933 = vadd.f32 0.0, %v932
        %v934 = vpop.f32.mrf.mxu0
        %v935 = vadd.f32 0.0, %v934
        %v936 = vpop.f32.mrf.mxu0
        %v937 = vadd.f32 0.0, %v936
        %938 = vmatprep.mubr.bf16.mxu0 %v446
        %939 = vmatmul.mubr.bf16.gmra.mxu0 %v445
        %v940 = vpop.f32.mrf.mxu0
        %v941 = vadd.f32 0.0, %v940
        %v942 = vpop.f32.mrf.mxu0
        %v943 = vadd.f32 0.0, %v942
        %v944 = vpop.f32.mrf.mxu0
        %v945 = vadd.f32 0.0, %v944
        %v946 = vpop.f32.mrf.mxu0
        %v947 = vadd.f32 0.0, %v946
        %948 = vdwg.mxu0
        %949 = vmatprep.subr.bf16.mxu0 %v725
        %950 = vmatpush1.bf16.msra.mxu0 %v724
        %951 = vmatprep.subr.bf16.mxu0 %v718
        %952 = vmatpush1.bf16.msra.mxu0 %v717
        %953 = vmatprep.subr.bf16.mxu0 %v711
        %954 = vmatpush1.bf16.msra.mxu0 %v710
        %955 = vmatprep.subr.bf16.mxu0 %v704
        %956 = vmatpush1.bf16.msra.mxu0 %v703
        %957 = vmatprep.subr.bf16.mxu0 %v697
        %958 = vmatpush1.bf16.msra.mxu0 %v696
        %959 = vmatprep.subr.bf16.mxu0 %v690
        %960 = vmatpush1.bf16.msra.mxu0 %v689
        %961 = vmatprep.subr.bf16.mxu0 %v683
        %962 = vmatpush1.bf16.msra.mxu0 %v682
        %963 = vmatprep.subr.bf16.mxu0 %v676
        %964 = vmatpush1.bf16.msra.mxu0 %v675
        %965 = vmatprep.subr.bf16.mxu0 %v781
        %966 = vmatpush2.bf16.msra.mxu0 %v780
        %967 = vmatprep.subr.bf16.mxu0 %v774
        %968 = vmatpush2.bf16.msra.mxu0 %v773
        %969 = vmatprep.subr.bf16.mxu0 %v767
        %970 = vmatpush2.bf16.msra.mxu0 %v766
        %971 = vmatprep.subr.bf16.mxu0 %v760
        %972 = vmatpush2.bf16.msra.mxu0 %v759
        %973 = vmatprep.subr.bf16.mxu0 %v753
        %974 = vmatpush2.bf16.msra.mxu0 %v752
        %975 = vmatprep.subr.bf16.mxu0 %v746
        %976 = vmatpush2.bf16.msra.mxu0 %v745
        %977 = vmatprep.subr.bf16.mxu0 %v739
        %978 = vmatpush2.bf16.msra.mxu0 %v738
        %979 = vmatprep.subr.bf16.mxu0 %v732
        %980 = vmatpush2.bf16.msra.mxu0 %v731
        %981 = vmatprep.mubr.bf16.mxu0 %v438
        %982 = vmatmul.mubr.bf16.gmra.mxu0 %v437
        %v983 = vpop.f32.mrf.mxu0
        %v984 = vadd.f32 0.0, %v983
        %v985 = vpop.f32.mrf.mxu0
        %v986 = vadd.f32 0.0, %v985
        %v987 = vpop.f32.mrf.mxu0
        %v988 = vadd.f32 0.0, %v987
        %v989 = vpop.f32.mrf.mxu0
        %v990 = vadd.f32 0.0, %v989
        %991 = vmatprep.mubr.bf16.mxu0 %v440
        %992 = vmatmul.mubr.bf16.gmra.mxu0 %v439
        %v993 = vpop.f32.mrf.mxu0
        %v994 = vadd.f32 0.0, %v993
        %v995 = vpop.f32.mrf.mxu0
        %v996 = vadd.f32 0.0, %v995
        %v997 = vpop.f32.mrf.mxu0
        %v998 = vadd.f32 0.0, %v997
        %v999 = vpop.f32.mrf.mxu0
        %v1000 = vadd.f32 0.0, %v999
        %1001 = vmatprep.mubr.bf16.mxu0 %v442
        %1002 = vmatmul.mubr.bf16.gmra.mxu0 %v441
        %v1003 = vpop.f32.mrf.mxu0
        %v1004 = vadd.f32 0.0, %v1003
        %v1005 = vpop.f32.mrf.mxu0
        %v1006 = vadd.f32 0.0, %v1005
        %v1007 = vpop.f32.mrf.mxu0
        %v1008 = vadd.f32 0.0, %v1007
        %v1009 = vpop.f32.mrf.mxu0
        %v1010 = vadd.f32 0.0, %v1009
        %1011 = vmatprep.mubr.bf16.mxu0 %v444
        %1012 = vmatmul.mubr.bf16.gmra.mxu0 %v443
        %v1013 = vpop.f32.mrf.mxu0
        %v1014 = vadd.f32 0.0, %v1013
        %v1015 = vpop.f32.mrf.mxu0
        %v1016 = vadd.f32 0.0, %v1015
        %v1017 = vpop.f32.mrf.mxu0
        %v1018 = vadd.f32 0.0, %v1017
        %v1019 = vpop.f32.mrf.mxu0
        %v1020 = vadd.f32 0.0, %v1019
        %1021 = vmatprep.mubr.bf16.mxu0 %v446
        %1022 = vmatmul.mubr.bf16.gmra.mxu0 %v445
        %v1023 = vpop.f32.mrf.mxu0
        %v1024 = vadd.f32 0.0, %v1023
        %v1025 = vpop.f32.mrf.mxu0
        %v1026 = vadd.f32 0.0, %v1025
        %v1027 = vpop.f32.mrf.mxu0
        %v1028 = vadd.f32 0.0, %v1027
        %v1029 = vpop.f32.mrf.mxu0
        %v1030 = vadd.f32 0.0, %v1029
        %1031 = vdwg.mxu0
        %1032 = vmatprep.subr.bf16.mxu0 0
        %1033 = vmatpush1.bf16.msra.mxu0 %v726
        %1034 = vmatprep.subr.bf16.mxu0 0
        %1035 = vmatpush1.bf16.msra.mxu0 %v719
        %1036 = vmatprep.subr.bf16.mxu0 0
        %1037 = vmatpush1.bf16.msra.mxu0 %v712
        %1038 = vmatprep.subr.bf16.mxu0 0
        %1039 = vmatpush1.bf16.msra.mxu0 %v705
        %1040 = vmatprep.subr.bf16.mxu0 0
        %1041 = vmatpush1.bf16.msra.mxu0 %v698
        %1042 = vmatprep.subr.bf16.mxu0 0
        %1043 = vmatpush1.bf16.msra.mxu0 %v691
        %1044 = vmatprep.subr.bf16.mxu0 0
        %1045 = vmatpush1.bf16.msra.mxu0 %v684
        %1046 = vmatprep.subr.bf16.mxu0 0
        %1047 = vmatpush1.bf16.msra.mxu0 %v677
        %1048 = vmatprep.subr.bf16.mxu0 0
        %1049 = vmatpush2.bf16.msra.mxu0 %v782
        %1050 = vmatprep.subr.bf16.mxu0 0
        %1051 = vmatpush2.bf16.msra.mxu0 %v775
        %1052 = vmatprep.subr.bf16.mxu0 0
        %1053 = vmatpush2.bf16.msra.mxu0 %v768
        %1054 = vmatprep.subr.bf16.mxu0 0
        %1055 = vmatpush2.bf16.msra.mxu0 %v761
        %1056 = vmatprep.subr.bf16.mxu0 0
        %1057 = vmatpush2.bf16.msra.mxu0 %v754
        %1058 = vmatprep.subr.bf16.mxu0 0
        %1059 = vmatpush2.bf16.msra.mxu0 %v747
        %1060 = vmatprep.subr.bf16.mxu0 0
        %1061 = vmatpush2.bf16.msra.mxu0 %v740
        %1062 = vmatprep.subr.bf16.mxu0 0
        %1063 = vmatpush2.bf16.msra.mxu0 %v733
        %1064 = vmatprep.mubr.bf16.mxu0 %v438
        %1065 = vmatmul.mubr.bf16.gmra.mxu0 %v437
        %v1066 = vpop.f32.mrf.mxu0
        %v1067 = vadd.f32 0.0, %v1066
        %v1068 = vpop.f32.mrf.mxu0
        %v1069 = vpop.f32.mrf.mxu0
        %v1070 = vadd.f32 0.0, %v1069
        %v1071 = vpop.f32.mrf.mxu0
        %1072 = vmatprep.mubr.bf16.mxu0 %v440
        %1073 = vmatmul.mubr.bf16.gmra.mxu0 %v439
        %v1074 = vpop.f32.mrf.mxu0
        %v1075 = vadd.f32 0.0, %v1074
        %v1076 = vpop.f32.mrf.mxu0
        %v1077 = vpop.f32.mrf.mxu0
        %v1078 = vadd.f32 0.0, %v1077
        %v1079 = vpop.f32.mrf.mxu0
        %1080 = vmatprep.mubr.bf16.mxu0 %v442
        %1081 = vmatmul.mubr.bf16.gmra.mxu0 %v441
        %v1082 = vpop.f32.mrf.mxu0
        %v1083 = vadd.f32 0.0, %v1082
        %v1084 = vpop.f32.mrf.mxu0
        %v1085 = vpop.f32.mrf.mxu0
        %v1086 = vadd.f32 0.0, %v1085
        %v1087 = vpop.f32.mrf.mxu0
        %1088 = vmatprep.mubr.bf16.mxu0 %v444
        %1089 = vmatmul.mubr.bf16.gmra.mxu0 %v443
        %v1090 = vpop.f32.mrf.mxu0
        %v1091 = vadd.f32 0.0, %v1090
        %v1092 = vpop.f32.mrf.mxu0
        %v1093 = vpop.f32.mrf.mxu0
        %v1094 = vadd.f32 0.0, %v1093
        %v1095 = vpop.f32.mrf.mxu0
        %1096 = vmatprep.mubr.bf16.mxu0 %v446
        %1097 = vmatmul.mubr.bf16.gmra.mxu0 %v445
        %v1098 = vpop.f32.mrf.mxu0
        %v1099 = vadd.f32 0.0, %v1098
        %v1100 = vpop.f32.mrf.mxu0
        %v1101 = vpop.f32.mrf.mxu0
        %v1102 = vadd.f32 0.0, %v1101
        %v1103 = vpop.f32.mrf.mxu0
        %1104 = vdwg.mxu0
        %p1105 = scmp.eq.s32.totalorder %s28, 0
        // Predicated region
        $region53: #{tpu_custom_call.1} parent=39 // pred_check
          %p1106 = pneg %p1105
        $region54: #{tpu_custom_call.1} parent=39 // pred_check_branch
          %1108 = sbr.rel (%p1106) target = $region56
        $region55: #{tpu_custom_call.1} parent=39 // pred_region
          %1109 = vst [vmem:[#allocation8] sm:$0xff] %v818
          %1110 = vst [vmem:[#allocation8 + $0x8] sm:$0xff] %v820
          %1111 = vst [vmem:[#allocation8 + $0x10] sm:$0xff] %v901
          %1112 = vst [vmem:[#allocation8 + $0x18] sm:$0xff] %v903
          %1113 = vst [vmem:[#allocation8 + $0x20] sm:$0xff] %v984
          %1114 = vst [vmem:[#allocation8 + $0x28] sm:$0xff] %v986
          %1115 = vst [vmem:[#allocation8 + $0x30] sm:$0xff] %v1067
          %1116 = vst [vmem:[#allocation8 + $0x38] sm:$0xff] %v822
          %1117 = vst [vmem:[#allocation8 + $0x40] sm:$0xff] %v824
          %1118 = vst [vmem:[#allocation8 + $0x48] sm:$0xff] %v905
          %1119 = vst [vmem:[#allocation8 + $0x50] sm:$0xff] %v907
          %1120 = vst [vmem:[#allocation8 + $0x58] sm:$0xff] %v988
          %1121 = vst [vmem:[#allocation8 + $0x60] sm:$0xff] %v990
          %1122 = vst [vmem:[#allocation8 + $0x68] sm:$0xff] %v1070
          %1123 = vst [vmem:[#allocation8 + $0x70] sm:$0xff] %v828
          %1124 = vst [vmem:[#allocation8 + $0x78] sm:$0xff] %v830
          %1125 = vst [vmem:[#allocation8 + $0x80] sm:$0xff] %v911
          %1126 = vst [vmem:[#allocation8 + $0x88] sm:$0xff] %v913
          %1127 = vst [vmem:[#allocation8 + $0x90] sm:$0xff] %v994
          %1128 = vst [vmem:[#allocation8 + $0x98] sm:$0xff] %v996
          %1129 = vst [vmem:[#allocation8 + $0xa0] sm:$0xff] %v1075
          %1130 = vst [vmem:[#allocation8 + $0xa8] sm:$0xff] %v832
          %1131 = vst [vmem:[#allocation8 + $0xb0] sm:$0xff] %v834
          %1132 = vst [vmem:[#allocation8 + $0xb8] sm:$0xff] %v915
          %1133 = vst [vmem:[#allocation8 + $0xc0] sm:$0xff] %v917
          %1134 = vst [vmem:[#allocation8 + $0xc8] sm:$0xff] %v998
          %1135 = vst [vmem:[#allocation8 + $0xd0] sm:$0xff] %v1000
          %1136 = vst [vmem:[#allocation8 + $0xd8] sm:$0xff] %v1078
          %1137 = vst [vmem:[#allocation8 + $0xe0] sm:$0xff] %v838
          %1138 = vst [vmem:[#allocation8 + $0xe8] sm:$0xff] %v840
          %1139 = vst [vmem:[#allocation8 + $0xf0] sm:$0xff] %v921
          %1140 = vst [vmem:[#allocation8 + $0xf8] sm:$0xff] %v923
          %1141 = vst [vmem:[#allocation8 + $0x100] sm:$0xff] %v1004
          %1142 = vst [vmem:[#allocation8 + $0x108] sm:$0xff] %v1006
          %1143 = vst [vmem:[#allocation8 + $0x110] sm:$0xff] %v1083
          %1144 = vst [vmem:[#allocation8 + $0x118] sm:$0xff] %v842
          %1145 = vst [vmem:[#allocation8 + $0x120] sm:$0xff] %v844
          %1146 = vst [vmem:[#allocation8 + $0x128] sm:$0xff] %v925
          %1147 = vst [vmem:[#allocation8 + $0x130] sm:$0xff] %v927
          %1148 = vst [vmem:[#allocation8 + $0x138] sm:$0xff] %v1008
          %1149 = vst [vmem:[#allocation8 + $0x140] sm:$0xff] %v1010
          %1150 = vst [vmem:[#allocation8 + $0x148] sm:$0xff] %v1086
          %1151 = vst [vmem:[#allocation8 + $0x150] sm:$0xff] %v848
          %1152 = vst [vmem:[#allocation8 + $0x158] sm:$0xff] %v850
          %1153 = vst [vmem:[#allocation8 + $0x160] sm:$0xff] %v931
          %1154 = vst [vmem:[#allocation8 + $0x168] sm:$0xff] %v933
          %1155 = vst [vmem:[#allocation8 + $0x170] sm:$0xff] %v1014
          %1156 = vst [vmem:[#allocation8 + $0x178] sm:$0xff] %v1016
          %1157 = vst [vmem:[#allocation8 + $0x180] sm:$0xff] %v1091
          %1158 = vst [vmem:[#allocation8 + $0x188] sm:$0xff] %v852
          %1159 = vst [vmem:[#allocation8 + $0x190] sm:$0xff] %v854
          %1160 = vst [vmem:[#allocation8 + $0x198] sm:$0xff] %v935
          %1161 = vst [vmem:[#allocation8 + $0x1a0] sm:$0xff] %v937
          %1162 = vst [vmem:[#allocation8 + $0x1a8] sm:$0xff] %v1018
          %1163 = vst [vmem:[#allocation8 + $0x1b0] sm:$0xff] %v1020
          %1164 = vst [vmem:[#allocation8 + $0x1b8] sm:$0xff] %v1094
          %1165 = vst [vmem:[#allocation8 + $0x1c0] sm:$0xff] %v858
          %1166 = vst [vmem:[#allocation8 + $0x1c8] sm:$0xff] %v860
          %1167 = vst [vmem:[#allocation8 + $0x1d0] sm:$0xff] %v941
          %1168 = vst [vmem:[#allocation8 + $0x1d8] sm:$0xff] %v943
          %1169 = vst [vmem:[#allocation8 + $0x1e0] sm:$0xff] %v1024
          %1170 = vst [vmem:[#allocation8 + $0x1e8] sm:$0xff] %v1026
          %1171 = vst [vmem:[#allocation8 + $0x1f0] sm:$0xff] %v1099
          %1172 = vst [vmem:[#allocation8 + $0x1f8] sm:$0xff] %v862
          %1173 = vst [vmem:[#allocation8 + $0x200] sm:$0xff] %v864
          %1174 = vst [vmem:[#allocation8 + $0x208] sm:$0xff] %v945
          %1175 = vst [vmem:[#allocation8 + $0x210] sm:$0xff] %v947
          %1176 = vst [vmem:[#allocation8 + $0x218] sm:$0xff] %v1028
          %1177 = vst [vmem:[#allocation8 + $0x220] sm:$0xff] %v1030
          %1178 = vst [vmem:[#allocation8 + $0x228] sm:$0xff] %v1102
        $region56: #{tpu_custom_call.1} parent=39 // pred_fallthru
          _
        %p1179 = scmp.ne.s32.totalorder %s28, 0
        // Predicated region
        $region57: #{tpu_custom_call.1} parent=39 // pred_check
          %p1180 = pneg %p1179
        $region58: #{tpu_custom_call.1} parent=39 // pred_check_branch
          %1182 = sbr.rel (%p1180) target = $region60
        $region59: #{tpu_custom_call.1} parent=39 // pred_region
          %v1183 = vld [vmem:[#allocation8] sm:$0xff]
          %v1184 = vld [vmem:[#allocation8 + $0x8] sm:$0xff]
          %v1185 = vld [vmem:[#allocation8 + $0x10] sm:$0xff]
          %v1186 = vld [vmem:[#allocation8 + $0x18] sm:$0xff]
          %v1187 = vld [vmem:[#allocation8 + $0x20] sm:$0xff]
          %v1188 = vld [vmem:[#allocation8 + $0x28] sm:$0xff]
          %v1189 = vld [vmem:[#allocation8 + $0x30] sm:$0xff]
          %v1190 = vld [vmem:[#allocation8 + $0x38] sm:$0xff]
          %v1191 = vld [vmem:[#allocation8 + $0x40] sm:$0xff]
          %v1192 = vld [vmem:[#allocation8 + $0x48] sm:$0xff]
          %v1193 = vld [vmem:[#allocation8 + $0x50] sm:$0xff]
          %v1194 = vld [vmem:[#allocation8 + $0x58] sm:$0xff]
          %v1195 = vld [vmem:[#allocation8 + $0x60] sm:$0xff]
          %v1196 = vld [vmem:[#allocation8 + $0x68] sm:$0xff]
          %v1197 = vld [vmem:[#allocation8 + $0x70] sm:$0xff]
          %v1198 = vld [vmem:[#allocation8 + $0x78] sm:$0xff]
          %v1199 = vld [vmem:[#allocation8 + $0x80] sm:$0xff]
          %v1200 = vld [vmem:[#allocation8 + $0x88] sm:$0xff]
          %v1201 = vld [vmem:[#allocation8 + $0x90] sm:$0xff]
          %v1202 = vld [vmem:[#allocation8 + $0x98] sm:$0xff]
          %v1203 = vld [vmem:[#allocation8 + $0xa0] sm:$0xff]
          %v1204 = vld [vmem:[#allocation8 + $0xa8] sm:$0xff]
          %v1205 = vld [vmem:[#allocation8 + $0xb0] sm:$0xff]
          %v1206 = vld [vmem:[#allocation8 + $0xb8] sm:$0xff]
          %v1207 = vld [vmem:[#allocation8 + $0xc0] sm:$0xff]
          %v1208 = vld [vmem:[#allocation8 + $0xc8] sm:$0xff]
          %v1209 = vld [vmem:[#allocation8 + $0xd0] sm:$0xff]
          %v1210 = vld [vmem:[#allocation8 + $0xd8] sm:$0xff]
          %v1211 = vld [vmem:[#allocation8 + $0xe0] sm:$0xff]
          %v1212 = vld [vmem:[#allocation8 + $0xe8] sm:$0xff]
          %v1213 = vld [vmem:[#allocation8 + $0xf0] sm:$0xff]
          %v1214 = vld [vmem:[#allocation8 + $0xf8] sm:$0xff]
          %v1215 = vld [vmem:[#allocation8 + $0x100] sm:$0xff]
          %v1216 = vld [vmem:[#allocation8 + $0x108] sm:$0xff]
          %v1217 = vld [vmem:[#allocation8 + $0x110] sm:$0xff]
          %v1218 = vld [vmem:[#allocation8 + $0x118] sm:$0xff]
          %v1219 = vld [vmem:[#allocation8 + $0x120] sm:$0xff]
          %v1220 = vld [vmem:[#allocation8 + $0x128] sm:$0xff]
          %v1221 = vld [vmem:[#allocation8 + $0x130] sm:$0xff]
          %v1222 = vld [vmem:[#allocation8 + $0x138] sm:$0xff]
          %v1223 = vld [vmem:[#allocation8 + $0x140] sm:$0xff]
          %v1224 = vld [vmem:[#allocation8 + $0x148] sm:$0xff]
          %v1225 = vld [vmem:[#allocation8 + $0x150] sm:$0xff]
          %v1226 = vld [vmem:[#allocation8 + $0x158] sm:$0xff]
          %v1227 = vld [vmem:[#allocation8 + $0x160] sm:$0xff]
          %v1228 = vld [vmem:[#allocation8 + $0x168] sm:$0xff]
          %v1229 = vld [vmem:[#allocation8 + $0x170] sm:$0xff]
          %v1230 = vld [vmem:[#allocation8 + $0x178] sm:$0xff]
          %v1231 = vld [vmem:[#allocation8 + $0x180] sm:$0xff]
          %v1232 = vld [vmem:[#allocation8 + $0x188] sm:$0xff]
          %v1233 = vld [vmem:[#allocation8 + $0x190] sm:$0xff]
          %v1234 = vld [vmem:[#allocation8 + $0x198] sm:$0xff]
          %v1235 = vld [vmem:[#allocation8 + $0x1a0] sm:$0xff]
          %v1236 = vld [vmem:[#allocation8 + $0x1a8] sm:$0xff]
          %v1237 = vld [vmem:[#allocation8 + $0x1b0] sm:$0xff]
          %v1238 = vld [vmem:[#allocation8 + $0x1b8] sm:$0xff]
          %v1239 = vld [vmem:[#allocation8 + $0x1c0] sm:$0xff]
          %v1240 = vld [vmem:[#allocation8 + $0x1c8] sm:$0xff]
          %v1241 = vld [vmem:[#allocation8 + $0x1d0] sm:$0xff]
          %v1242 = vld [vmem:[#allocation8 + $0x1d8] sm:$0xff]
          %v1243 = vld [vmem:[#allocation8 + $0x1e0] sm:$0xff]
          %v1244 = vld [vmem:[#allocation8 + $0x1e8] sm:$0xff]
          %v1245 = vld [vmem:[#allocation8 + $0x1f0] sm:$0xff]
          %v1246 = vld [vmem:[#allocation8 + $0x1f8] sm:$0xff]
          %v1247 = vld [vmem:[#allocation8 + $0x200] sm:$0xff]
          %v1248 = vld [vmem:[#allocation8 + $0x208] sm:$0xff]
          %v1249 = vld [vmem:[#allocation8 + $0x210] sm:$0xff]
          %v1250 = vld [vmem:[#allocation8 + $0x218] sm:$0xff]
          %v1251 = vld [vmem:[#allocation8 + $0x220] sm:$0xff]
          %v1252 = vld [vmem:[#allocation8 + $0x228] sm:$0xff]
          %v1253 = vadd.f32 %v1183, %v818
          %v1254 = vadd.f32 %v1184, %v820
          %v1255 = vadd.f32 %v1185, %v901
          %v1256 = vadd.f32 %v1186, %v903
          %v1257 = vadd.f32 %v1187, %v984
          %v1258 = vadd.f32 %v1188, %v986
          %v1259 = vadd.f32 %v1189, %v1067
          %v1260 = vadd.f32 %v1190, %v822
          %v1261 = vadd.f32 %v1191, %v824
          %v1262 = vadd.f32 %v1192, %v905
          %v1263 = vadd.f32 %v1193, %v907
          %v1264 = vadd.f32 %v1194, %v988
          %v1265 = vadd.f32 %v1195, %v990
          %v1266 = vadd.f32 %v1196, %v1070
          %v1267 = vadd.f32 %v1197, %v828
          %v1268 = vadd.f32 %v1198, %v830
          %v1269 = vadd.f32 %v1199, %v911
          %v1270 = vadd.f32 %v1200, %v913
          %v1271 = vadd.f32 %v1201, %v994
          %v1272 = vadd.f32 %v1202, %v996
          %v1273 = vadd.f32 %v1203, %v1075
          %v1274 = vadd.f32 %v1204, %v832
          %v1275 = vadd.f32 %v1205, %v834
          %v1276 = vadd.f32 %v1206, %v915
          %v1277 = vadd.f32 %v1207, %v917
          %v1278 = vadd.f32 %v1208, %v998
          %v1279 = vadd.f32 %v1209, %v1000
          %v1280 = vadd.f32 %v1210, %v1078
          %v1281 = vadd.f32 %v1211, %v838
          %v1282 = vadd.f32 %v1212, %v840
          %v1283 = vadd.f32 %v1213, %v921
          %v1284 = vadd.f32 %v1214, %v923
          %v1285 = vadd.f32 %v1215, %v1004
          %v1286 = vadd.f32 %v1216, %v1006
          %v1287 = vadd.f32 %v1217, %v1083
          %v1288 = vadd.f32 %v1218, %v842
          %v1289 = vadd.f32 %v1219, %v844
          %v1290 = vadd.f32 %v1220, %v925
          %v1291 = vadd.f32 %v1221, %v927
          %v1292 = vadd.f32 %v1222, %v1008
          %v1293 = vadd.f32 %v1223, %v1010
          %v1294 = vadd.f32 %v1224, %v1086
          %v1295 = vadd.f32 %v1225, %v848
          %v1296 = vadd.f32 %v1226, %v850
          %v1297 = vadd.f32 %v1227, %v931
          %v1298 = vadd.f32 %v1228, %v933
          %v1299 = vadd.f32 %v1229, %v1014
          %v1300 = vadd.f32 %v1230, %v1016
          %v1301 = vadd.f32 %v1231, %v1091
          %v1302 = vadd.f32 %v1232, %v852
          %v1303 = vadd.f32 %v1233, %v854
          %v1304 = vadd.f32 %v1234, %v935
          %v1305 = vadd.f32 %v1235, %v937
          %v1306 = vadd.f32 %v1236, %v1018
          %v1307 = vadd.f32 %v1237, %v1020
          %v1308 = vadd.f32 %v1238, %v1094
          %v1309 = vadd.f32 %v1239, %v858
          %v1310 = vadd.f32 %v1240, %v860
          %v1311 = vadd.f32 %v1241, %v941
          %v1312 = vadd.f32 %v1242, %v943
          %v1313 = vadd.f32 %v1243, %v1024
          %v1314 = vadd.f32 %v1244, %v1026
          %v1315 = vadd.f32 %v1245, %v1099
          %v1316 = vadd.f32 %v1246, %v862
          %v1317 = vadd.f32 %v1247, %v864
          %v1318 = vadd.f32 %v1248, %v945
          %v1319 = vadd.f32 %v1249, %v947
          %v1320 = vadd.f32 %v1250, %v1028
          %v1321 = vadd.f32 %v1251, %v1030
          %v1322 = vadd.f32 %v1252, %v1102
          %1323 = vst [vmem:[#allocation8] sm:$0xff] %v1253
          %1324 = vst [vmem:[#allocation8 + $0x8] sm:$0xff] %v1254
          %1325 = vst [vmem:[#allocation8 + $0x10] sm:$0xff] %v1255
          %1326 = vst [vmem:[#allocation8 + $0x18] sm:$0xff] %v1256
          %1327 = vst [vmem:[#allocation8 + $0x20] sm:$0xff] %v1257
          %1328 = vst [vmem:[#allocation8 + $0x28] sm:$0xff] %v1258
          %1329 = vst [vmem:[#allocation8 + $0x30] sm:$0xff] %v1259
          %1330 = vst [vmem:[#allocation8 + $0x38] sm:$0xff] %v1260
          %1331 = vst [vmem:[#allocation8 + $0x40] sm:$0xff] %v1261
          %1332 = vst [vmem:[#allocation8 + $0x48] sm:$0xff] %v1262
          %1333 = vst [vmem:[#allocation8 + $0x50] sm:$0xff] %v1263
          %1334 = vst [vmem:[#allocation8 + $0x58] sm:$0xff] %v1264
          %1335 = vst [vmem:[#allocation8 + $0x60] sm:$0xff] %v1265
          %1336 = vst [vmem:[#allocation8 + $0x68] sm:$0xff] %v1266
          %1337 = vst [vmem:[#allocation8 + $0x70] sm:$0xff] %v1267
          %1338 = vst [vmem:[#allocation8 + $0x78] sm:$0xff] %v1268
          %1339 = vst [vmem:[#allocation8 + $0x80] sm:$0xff] %v1269
          %1340 = vst [vmem:[#allocation8 + $0x88] sm:$0xff] %v1270
          %1341 = vst [vmem:[#allocation8 + $0x90] sm:$0xff] %v1271
          %1342 = vst [vmem:[#allocation8 + $0x98] sm:$0xff] %v1272
          %1343 = vst [vmem:[#allocation8 + $0xa0] sm:$0xff] %v1273
          %1344 = vst [vmem:[#allocation8 + $0xa8] sm:$0xff] %v1274
          %1345 = vst [vmem:[#allocation8 + $0xb0] sm:$0xff] %v1275
          %1346 = vst [vmem:[#allocation8 + $0xb8] sm:$0xff] %v1276
          %1347 = vst [vmem:[#allocation8 + $0xc0] sm:$0xff] %v1277
          %1348 = vst [vmem:[#allocation8 + $0xc8] sm:$0xff] %v1278
          %1349 = vst [vmem:[#allocation8 + $0xd0] sm:$0xff] %v1279
          %1350 = vst [vmem:[#allocation8 + $0xd8] sm:$0xff] %v1280
          %1351 = vst [vmem:[#allocation8 + $0xe0] sm:$0xff] %v1281
          %1352 = vst [vmem:[#allocation8 + $0xe8] sm:$0xff] %v1282
          %1353 = vst [vmem:[#allocation8 + $0xf0] sm:$0xff] %v1283
          %1354 = vst [vmem:[#allocation8 + $0xf8] sm:$0xff] %v1284
          %1355 = vst [vmem:[#allocation8 + $0x100] sm:$0xff] %v1285
          %1356 = vst [vmem:[#allocation8 + $0x108] sm:$0xff] %v1286
          %1357 = vst [vmem:[#allocation8 + $0x110] sm:$0xff] %v1287
          %1358 = vst [vmem:[#allocation8 + $0x118] sm:$0xff] %v1288
          %1359 = vst [vmem:[#allocation8 + $0x120] sm:$0xff] %v1289
          %1360 = vst [vmem:[#allocation8 + $0x128] sm:$0xff] %v1290
          %1361 = vst [vmem:[#allocation8 + $0x130] sm:$0xff] %v1291
          %1362 = vst [vmem:[#allocation8 + $0x138] sm:$0xff] %v1292
          %1363 = vst [vmem:[#allocation8 + $0x140] sm:$0xff] %v1293
          %1364 = vst [vmem:[#allocation8 + $0x148] sm:$0xff] %v1294
          %1365 = vst [vmem:[#allocation8 + $0x150] sm:$0xff] %v1295
          %1366 = vst [vmem:[#allocation8 + $0x158] sm:$0xff] %v1296
          %1367 = vst [vmem:[#allocation8 + $0x160] sm:$0xff] %v1297
          %1368 = vst [vmem:[#allocation8 + $0x168] sm:$0xff] %v1298
          %1369 = vst [vmem:[#allocation8 + $0x170] sm:$0xff] %v1299
          %1370 = vst [vmem:[#allocation8 + $0x178] sm:$0xff] %v1300
          %1371 = vst [vmem:[#allocation8 + $0x180] sm:$0xff] %v1301
          %1372 = vst [vmem:[#allocation8 + $0x188] sm:$0xff] %v1302
          %1373 = vst [vmem:[#allocation8 + $0x190] sm:$0xff] %v1303
          %1374 = vst [vmem:[#allocation8 + $0x198] sm:$0xff] %v1304
          %1375 = vst [vmem:[#allocation8 + $0x1a0] sm:$0xff] %v1305
          %1376 = vst [vmem:[#allocation8 + $0x1a8] sm:$0xff] %v1306
          %1377 = vst [vmem:[#allocation8 + $0x1b0] sm:$0xff] %v1307
          %1378 = vst [vmem:[#allocation8 + $0x1b8] sm:$0xff] %v1308
          %1379 = vst [vmem:[#allocation8 + $0x1c0] sm:$0xff] %v1309
          %1380 = vst [vmem:[#allocation8 + $0x1c8] sm:$0xff] %v1310
          %1381 = vst [vmem:[#allocation8 + $0x1d0] sm:$0xff] %v1311
          %1382 = vst [vmem:[#allocation8 + $0x1d8] sm:$0xff] %v1312
          %1383 = vst [vmem:[#allocation8 + $0x1e0] sm:$0xff] %v1313
          %1384 = vst [vmem:[#allocation8 + $0x1e8] sm:$0xff] %v1314
          %1385 = vst [vmem:[#allocation8 + $0x1f0] sm:$0xff] %v1315
          %1386 = vst [vmem:[#allocation8 + $0x1f8] sm:$0xff] %v1316
          %1387 = vst [vmem:[#allocation8 + $0x200] sm:$0xff] %v1317
          %1388 = vst [vmem:[#allocation8 + $0x208] sm:$0xff] %v1318
          %1389 = vst [vmem:[#allocation8 + $0x210] sm:$0xff] %v1319
          %1390 = vst [vmem:[#allocation8 + $0x218] sm:$0xff] %v1320
          %1391 = vst [vmem:[#allocation8 + $0x220] sm:$0xff] %v1321
          %1392 = vst [vmem:[#allocation8 + $0x228] sm:$0xff] %v1322
        $region60: #{tpu_custom_call.1} parent=39 // pred_fallthru
          _
        %p1393 = scmp.eq.s32.totalorder %s28, 1
        // Predicated region
        $region61: #{tpu_custom_call.1} parent=39 // pred_check
          %p1394 = pneg %p1393
        $region62: #{tpu_custom_call.1} parent=39 // pred_check_branch
          %1396 = sbr.rel (%p1394) target = $region64
        $region63: #{tpu_custom_call.1} parent=39 // pred_region
          %v1397 = vld [vmem:[#allocation8] sm:$0xff]
          %v1398 = vld [vmem:[#allocation8 + $0x8] sm:$0xff]
          %v1399 = vld [vmem:[#allocation8 + $0x10] sm:$0xff]
          %v1400 = vld [vmem:[#allocation8 + $0x18] sm:$0xff]
          %v1401 = vld [vmem:[#allocation8 + $0x20] sm:$0xff]
          %v1402 = vld [vmem:[#allocation8 + $0x28] sm:$0xff]
          %v1403 = vld [vmem:[#allocation8 + $0x30] sm:$0xff]
          %v1404 = vld [vmem:[#allocation8 + $0x38] sm:$0xff]
          %v1405 = vld [vmem:[#allocation8 + $0x40] sm:$0xff]
          %v1406 = vld [vmem:[#allocation8 + $0x48] sm:$0xff]
          %v1407 = vld [vmem:[#allocation8 + $0x50] sm:$0xff]
          %v1408 = vld [vmem:[#allocation8 + $0x58] sm:$0xff]
          %v1409 = vld [vmem:[#allocation8 + $0x60] sm:$0xff]
          %v1410 = vld [vmem:[#allocation8 + $0x68] sm:$0xff]
          %v1411 = vld [vmem:[#allocation8 + $0x70] sm:$0xff]
          %v1412 = vld [vmem:[#allocation8 + $0x78] sm:$0xff]
          %v1413 = vld [vmem:[#allocation8 + $0x80] sm:$0xff]
          %v1414 = vld [vmem:[#allocation8 + $0x88] sm:$0xff]
          %v1415 = vld [vmem:[#allocation8 + $0x90] sm:$0xff]
          %v1416 = vld [vmem:[#allocation8 + $0x98] sm:$0xff]
          %v1417 = vld [vmem:[#allocation8 + $0xa0] sm:$0xff]
          %v1418 = vld [vmem:[#allocation8 + $0xa8] sm:$0xff]
          %v1419 = vld [vmem:[#allocation8 + $0xb0] sm:$0xff]
          %v1420 = vld [vmem:[#allocation8 + $0xb8] sm:$0xff]
          %v1421 = vld [vmem:[#allocation8 + $0xc0] sm:$0xff]
          %v1422 = vld [vmem:[#allocation8 + $0xc8] sm:$0xff]
          %v1423 = vld [vmem:[#allocation8 + $0xd0] sm:$0xff]
          %v1424 = vld [vmem:[#allocation8 + $0xd8] sm:$0xff]
          %v1425 = vld [vmem:[#allocation8 + $0xe0] sm:$0xff]
          %v1426 = vld [vmem:[#allocation8 + $0xe8] sm:$0xff]
          %v1427 = vld [vmem:[#allocation8 + $0xf0] sm:$0xff]
          %v1428 = vld [vmem:[#allocation8 + $0xf8] sm:$0xff]
          %v1429 = vld [vmem:[#allocation8 + $0x100] sm:$0xff]
          %v1430 = vld [vmem:[#allocation8 + $0x108] sm:$0xff]
          %v1431 = vld [vmem:[#allocation8 + $0x110] sm:$0xff]
          %v1432 = vld [vmem:[#allocation8 + $0x118] sm:$0xff]
          %v1433 = vld [vmem:[#allocation8 + $0x120] sm:$0xff]
          %v1434 = vld [vmem:[#allocation8 + $0x128] sm:$0xff]
          %v1435 = vld [vmem:[#allocation8 + $0x130] sm:$0xff]
          %v1436 = vld [vmem:[#allocation8 + $0x138] sm:$0xff]
          %v1437 = vld [vmem:[#allocation8 + $0x140] sm:$0xff]
          %v1438 = vld [vmem:[#allocation8 + $0x148] sm:$0xff]
          %v1439 = vld [vmem:[#allocation8 + $0x150] sm:$0xff]
          %v1440 = vld [vmem:[#allocation8 + $0x158] sm:$0xff]
          %v1441 = vld [vmem:[#allocation8 + $0x160] sm:$0xff]
          %v1442 = vld [vmem:[#allocation8 + $0x168] sm:$0xff]
          %v1443 = vld [vmem:[#allocation8 + $0x170] sm:$0xff]
          %v1444 = vld [vmem:[#allocation8 + $0x178] sm:$0xff]
          %v1445 = vld [vmem:[#allocation8 + $0x180] sm:$0xff]
          %v1446 = vld [vmem:[#allocation8 + $0x188] sm:$0xff]
          %v1447 = vld [vmem:[#allocation8 + $0x190] sm:$0xff]
          %v1448 = vld [vmem:[#allocation8 + $0x198] sm:$0xff]
          %v1449 = vld [vmem:[#allocation8 + $0x1a0] sm:$0xff]
          %v1450 = vld [vmem:[#allocation8 + $0x1a8] sm:$0xff]
          %v1451 = vld [vmem:[#allocation8 + $0x1b0] sm:$0xff]
          %v1452 = vld [vmem:[#allocation8 + $0x1b8] sm:$0xff]
          %v1453 = vld [vmem:[#allocation8 + $0x1c0] sm:$0xff]
          %v1454 = vld [vmem:[#allocation8 + $0x1c8] sm:$0xff]
          %v1455 = vld [vmem:[#allocation8 + $0x1d0] sm:$0xff]
          %v1456 = vld [vmem:[#allocation8 + $0x1d8] sm:$0xff]
          %v1457 = vld [vmem:[#allocation8 + $0x1e0] sm:$0xff]
          %v1458 = vld [vmem:[#allocation8 + $0x1e8] sm:$0xff]
          %v1459 = vld [vmem:[#allocation8 + $0x1f0] sm:$0xff]
          %v1460 = vld [vmem:[#allocation8 + $0x1f8] sm:$0xff]
          %v1461 = vld [vmem:[#allocation8 + $0x200] sm:$0xff]
          %v1462 = vld [vmem:[#allocation8 + $0x208] sm:$0xff]
          %v1463 = vld [vmem:[#allocation8 + $0x210] sm:$0xff]
          %v1464 = vld [vmem:[#allocation8 + $0x218] sm:$0xff]
          %v1465 = vld [vmem:[#allocation8 + $0x220] sm:$0xff]
          %v1466 = vld [vmem:[#allocation8 + $0x228] sm:$0xff]
          %v1467 = vadd.f32 %v1397, %v1398
          %v1468 = vadd.f32 %v1467, %v1399
          %v1469 = vadd.f32 %v1468, %v1400
          %v1470 = vadd.f32 %v1469, %v1401
          %v1471 = vadd.f32 %v1470, %v1402
          %v1472 = vadd.f32 %v1471, %v1403
          %1473 = vadd.xlane.f32.xlu0 %v1472
          %v1474 = vpop.xlane.xlu0 %1473
          %v1475 = vadd.f32 %v1404, %v1405
          %v1476 = vadd.f32 %v1475, %v1406
          %v1477 = vadd.f32 %v1476, %v1407
          %v1478 = vadd.f32 %v1477, %v1408
          %v1479 = vadd.f32 %v1478, %v1409
          %v1480 = vadd.f32 %v1479, %v1410
          %1481 = vadd.xlane.f32.xlu0 %v1480
          %v1482 = vpop.xlane.xlu0 %1481
          %v1483 = vadd.f32 %v1411, %v1412
          %v1484 = vadd.f32 %v1483, %v1413
          %v1485 = vadd.f32 %v1484, %v1414
          %v1486 = vadd.f32 %v1485, %v1415
          %v1487 = vadd.f32 %v1486, %v1416
          %v1488 = vadd.f32 %v1487, %v1417
          %1489 = vadd.xlane.f32.xlu0 %v1488
          %v1490 = vpop.xlane.xlu0 %1489
          %v1491 = vadd.f32 %v1418, %v1419
          %v1492 = vadd.f32 %v1491, %v1420
          %v1493 = vadd.f32 %v1492, %v1421
          %v1494 = vadd.f32 %v1493, %v1422
          %v1495 = vadd.f32 %v1494, %v1423
          %v1496 = vadd.f32 %v1495, %v1424
          %1497 = vadd.xlane.f32.xlu0 %v1496
          %v1498 = vpop.xlane.xlu0 %1497
          %v1499 = vadd.f32 %v1425, %v1426
          %v1500 = vadd.f32 %v1499, %v1427
          %v1501 = vadd.f32 %v1500, %v1428
          %v1502 = vadd.f32 %v1501, %v1429
          %v1503 = vadd.f32 %v1502, %v1430
          %v1504 = vadd.f32 %v1503, %v1431
          %1505 = vadd.xlane.f32.xlu0 %v1504
          %v1506 = vpop.xlane.xlu0 %1505
          %v1507 = vadd.f32 %v1432, %v1433
          %v1508 = vadd.f32 %v1507, %v1434
          %v1509 = vadd.f32 %v1508, %v1435
          %v1510 = vadd.f32 %v1509, %v1436
          %v1511 = vadd.f32 %v1510, %v1437
          %v1512 = vadd.f32 %v1511, %v1438
          %1513 = vadd.xlane.f32.xlu0 %v1512
          %v1514 = vpop.xlane.xlu0 %1513
          %v1515 = vadd.f32 %v1439, %v1440
          %v1516 = vadd.f32 %v1515, %v1441
          %v1517 = vadd.f32 %v1516, %v1442
          %v1518 = vadd.f32 %v1517, %v1443
          %v1519 = vadd.f32 %v1518, %v1444
          %v1520 = vadd.f32 %v1519, %v1445
          %1521 = vadd.xlane.f32.xlu0 %v1520
          %v1522 = vpop.xlane.xlu0 %1521
          %v1523 = vadd.f32 %v1446, %v1447
          %v1524 = vadd.f32 %v1523, %v1448
          %v1525 = vadd.f32 %v1524, %v1449
          %v1526 = vadd.f32 %v1525, %v1450
          %v1527 = vadd.f32 %v1526, %v1451
          %v1528 = vadd.f32 %v1527, %v1452
          %1529 = vadd.xlane.f32.xlu0 %v1528
          %v1530 = vpop.xlane.xlu0 %1529
          %v1531 = vadd.f32 %v1453, %v1454
          %v1532 = vadd.f32 %v1531, %v1455
          %v1533 = vadd.f32 %v1532, %v1456
          %v1534 = vadd.f32 %v1533, %v1457
          %v1535 = vadd.f32 %v1534, %v1458
          %v1536 = vadd.f32 %v1535, %v1459
          %1537 = vadd.xlane.f32.xlu0 %v1536
          %v1538 = vpop.xlane.xlu0 %1537
          %v1539 = vadd.f32 %v1460, %v1461
          %v1540 = vadd.f32 %v1539, %v1462
          %v1541 = vadd.f32 %v1540, %v1463
          %v1542 = vadd.f32 %v1541, %v1464
          %v1543 = vadd.f32 %v1542, %v1465
          %v1544 = vadd.f32 %v1543, %v1466
          %1545 = vadd.xlane.f32.xlu0 %v1544
          %v1546 = vpop.xlane.xlu0 %1545
          %v1547 = vmul.f32 %v1397, %v1397
          %v1548 = vmul.f32 %v1398, %v1398
          %v1549 = vmul.f32 %v1399, %v1399
          %v1550 = vmul.f32 %v1400, %v1400
          %v1551 = vmul.f32 %v1401, %v1401
          %v1552 = vmul.f32 %v1402, %v1402
          %v1553 = vmul.f32 %v1403, %v1403
          %v1554 = vmul.f32 %v1404, %v1404
          %v1555 = vmul.f32 %v1405, %v1405
          %v1556 = vmul.f32 %v1406, %v1406
          %v1557 = vmul.f32 %v1407, %v1407
          %v1558 = vmul.f32 %v1408, %v1408
          %v1559 = vmul.f32 %v1409, %v1409
          %v1560 = vmul.f32 %v1410, %v1410
          %v1561 = vmul.f32 %v1411, %v1411
          %v1562 = vmul.f32 %v1412, %v1412
          %v1563 = vmul.f32 %v1413, %v1413
          %v1564 = vmul.f32 %v1414, %v1414
          %v1565 = vmul.f32 %v1415, %v1415
          %v1566 = vmul.f32 %v1416, %v1416
          %v1567 = vmul.f32 %v1417, %v1417
          %v1568 = vmul.f32 %v1418, %v1418
          %v1569 = vmul.f32 %v1419, %v1419
          %v1570 = vmul.f32 %v1420, %v1420
          %v1571 = vmul.f32 %v1421, %v1421
          %v1572 = vmul.f32 %v1422, %v1422
          %v1573 = vmul.f32 %v1423, %v1423
          %v1574 = vmul.f32 %v1424, %v1424
          %v1575 = vmul.f32 %v1425, %v1425
          %v1576 = vmul.f32 %v1426, %v1426
          %v1577 = vmul.f32 %v1427, %v1427
          %v1578 = vmul.f32 %v1428, %v1428
          %v1579 = vmul.f32 %v1429, %v1429
          %v1580 = vmul.f32 %v1430, %v1430
          %v1581 = vmul.f32 %v1431, %v1431
          %v1582 = vmul.f32 %v1432, %v1432
          %v1583 = vmul.f32 %v1433, %v1433
          %v1584 = vmul.f32 %v1434, %v1434
          %v1585 = vmul.f32 %v1435, %v1435
          %v1586 = vmul.f32 %v1436, %v1436
          %v1587 = vmul.f32 %v1437, %v1437
          %v1588 = vmul.f32 %v1438, %v1438
          %v1589 = vmul.f32 %v1439, %v1439
          %v1590 = vmul.f32 %v1440, %v1440
          %v1591 = vmul.f32 %v1441, %v1441
          %v1592 = vmul.f32 %v1442, %v1442
          %v1593 = vmul.f32 %v1443, %v1443
          %v1594 = vmul.f32 %v1444, %v1444
          %v1595 = vmul.f32 %v1445, %v1445
          %v1596 = vmul.f32 %v1446, %v1446
          %v1597 = vmul.f32 %v1447, %v1447
          %v1598 = vmul.f32 %v1448, %v1448
          %v1599 = vmul.f32 %v1449, %v1449
          %v1600 = vmul.f32 %v1450, %v1450
          %v1601 = vmul.f32 %v1451, %v1451
          %v1602 = vmul.f32 %v1452, %v1452
          %v1603 = vmul.f32 %v1453, %v1453
          %v1604 = vmul.f32 %v1454, %v1454
          %v1605 = vmul.f32 %v1455, %v1455
          %v1606 = vmul.f32 %v1456, %v1456
          %v1607 = vmul.f32 %v1457, %v1457
          %v1608 = vmul.f32 %v1458, %v1458
          %v1609 = vmul.f32 %v1459, %v1459
          %v1610 = vmul.f32 %v1460, %v1460
          %v1611 = vmul.f32 %v1461, %v1461
          %v1612 = vmul.f32 %v1462, %v1462
          %v1613 = vmul.f32 %v1463, %v1463
          %v1614 = vmul.f32 %v1464, %v1464
          %v1615 = vmul.f32 %v1465, %v1465
          %v1616 = vmul.f32 %v1466, %v1466
          %v1617 = vadd.f32 %v1547, %v1548
          %v1618 = vadd.f32 %v1617, %v1549
          %v1619 = vadd.f32 %v1618, %v1550
          %v1620 = vadd.f32 %v1619, %v1551
          %v1621 = vadd.f32 %v1620, %v1552
          %v1622 = vadd.f32 %v1621, %v1553
          %1623 = vadd.xlane.f32.xlu0 %v1622
          %v1624 = vpop.xlane.xlu0 %1623
          %v1625 = vadd.f32 %v1554, %v1555
          %v1626 = vadd.f32 %v1625, %v1556
          %v1627 = vadd.f32 %v1626, %v1557
          %v1628 = vadd.f32 %v1627, %v1558
          %v1629 = vadd.f32 %v1628, %v1559
          %v1630 = vadd.f32 %v1629, %v1560
          %1631 = vadd.xlane.f32.xlu0 %v1630
          %v1632 = vpop.xlane.xlu0 %1631
          %v1633 = vadd.f32 %v1561, %v1562
          %v1634 = vadd.f32 %v1633, %v1563
          %v1635 = vadd.f32 %v1634, %v1564
          %v1636 = vadd.f32 %v1635, %v1565
          %v1637 = vadd.f32 %v1636, %v1566
          %v1638 = vadd.f32 %v1637, %v1567
          %1639 = vadd.xlane.f32.xlu0 %v1638
          %v1640 = vpop.xlane.xlu0 %1639
          %v1641 = vadd.f32 %v1568, %v1569
          %v1642 = vadd.f32 %v1641, %v1570
          %v1643 = vadd.f32 %v1642, %v1571
          %v1644 = vadd.f32 %v1643, %v1572
          %v1645 = vadd.f32 %v1644, %v1573
          %v1646 = vadd.f32 %v1645, %v1574
          %1647 = vadd.xlane.f32.xlu0 %v1646
          %v1648 = vpop.xlane.xlu0 %1647
          %v1649 = vadd.f32 %v1575, %v1576
          %v1650 = vadd.f32 %v1649, %v1577
          %v1651 = vadd.f32 %v1650, %v1578
          %v1652 = vadd.f32 %v1651, %v1579
          %v1653 = vadd.f32 %v1652, %v1580
          %v1654 = vadd.f32 %v1653, %v1581
          %1655 = vadd.xlane.f32.xlu0 %v1654
          %v1656 = vpop.xlane.xlu0 %1655
          %v1657 = vadd.f32 %v1582, %v1583
          %v1658 = vadd.f32 %v1657, %v1584
          %v1659 = vadd.f32 %v1658, %v1585
          %v1660 = vadd.f32 %v1659, %v1586
          %v1661 = vadd.f32 %v1660, %v1587
          %v1662 = vadd.f32 %v1661, %v1588
          %1663 = vadd.xlane.f32.xlu0 %v1662
          %v1664 = vpop.xlane.xlu0 %1663
          %v1665 = vadd.f32 %v1589, %v1590
          %v1666 = vadd.f32 %v1665, %v1591
          %v1667 = vadd.f32 %v1666, %v1592
          %v1668 = vadd.f32 %v1667, %v1593
          %v1669 = vadd.f32 %v1668, %v1594
          %v1670 = vadd.f32 %v1669, %v1595
          %1671 = vadd.xlane.f32.xlu0 %v1670
          %v1672 = vpop.xlane.xlu0 %1671
          %v1673 = vadd.f32 %v1596, %v1597
          %v1674 = vadd.f32 %v1673, %v1598
          %v1675 = vadd.f32 %v1674, %v1599
          %v1676 = vadd.f32 %v1675, %v1600
          %v1677 = vadd.f32 %v1676, %v1601
          %v1678 = vadd.f32 %v1677, %v1602
          %1679 = vadd.xlane.f32.xlu0 %v1678
          %v1680 = vpop.xlane.xlu0 %1679
          %v1681 = vadd.f32 %v1603, %v1604
          %v1682 = vadd.f32 %v1681, %v1605
          %v1683 = vadd.f32 %v1682, %v1606
          %v1684 = vadd.f32 %v1683, %v1607
          %v1685 = vadd.f32 %v1684, %v1608
          %v1686 = vadd.f32 %v1685, %v1609
          %1687 = vadd.xlane.f32.xlu0 %v1686
          %v1688 = vpop.xlane.xlu0 %1687
          %v1689 = vadd.f32 %v1610, %v1611
          %v1690 = vadd.f32 %v1689, %v1612
          %v1691 = vadd.f32 %v1690, %v1613
          %v1692 = vadd.f32 %v1691, %v1614
          %v1693 = vadd.f32 %v1692, %v1615
          %v1694 = vadd.f32 %v1693, %v1616
          %1695 = vadd.xlane.f32.xlu0 %v1694
          %v1696 = vpop.xlane.xlu0 %1695
          %v1697 = vmul.f32 %v1474, 0.0012755102
          %v1698 = vmul.f32 %v1482, 0.0012755102
          %v1699 = vmul.f32 %v1490, 0.0012755102
          %v1700 = vmul.f32 %v1498, 0.0012755102
          %v1701 = vmul.f32 %v1506, 0.0012755102
          %v1702 = vmul.f32 %v1514, 0.0012755102
          %v1703 = vmul.f32 %v1522, 0.0012755102
          %v1704 = vmul.f32 %v1530, 0.0012755102
          %v1705 = vmul.f32 %v1538, 0.0012755102
          %v1706 = vmul.f32 %v1546, 0.0012755102
          %v1707 = vmul.f32 %v1624, 0.0012755102
          %v1708 = vmul.f32 %v1632, 0.0012755102
          %v1709 = vmul.f32 %v1640, 0.0012755102
          %v1710 = vmul.f32 %v1648, 0.0012755102
          %v1711 = vmul.f32 %v1656, 0.0012755102
          %v1712 = vmul.f32 %v1664, 0.0012755102
          %v1713 = vmul.f32 %v1672, 0.0012755102
          %v1714 = vmul.f32 %v1680, 0.0012755102
          %v1715 = vmul.f32 %v1688, 0.0012755102
          %v1716 = vmul.f32 %v1696, 0.0012755102
          %v1717 = vmul.f32 %v1697, %v1697
          %v1718 = vmul.f32 %v1698, %v1698
          %v1719 = vmul.f32 %v1699, %v1699
          %v1720 = vmul.f32 %v1700, %v1700
          %v1721 = vmul.f32 %v1701, %v1701
          %v1722 = vmul.f32 %v1702, %v1702
          %v1723 = vmul.f32 %v1703, %v1703
          %v1724 = vmul.f32 %v1704, %v1704
          %v1725 = vmul.f32 %v1705, %v1705
          %v1726 = vmul.f32 %v1706, %v1706
          %v1727 = vsub.f32 %v1707, %v1717
          %v1728 = vsub.f32 %v1708, %v1718
          %v1729 = vsub.f32 %v1709, %v1719
          %v1730 = vsub.f32 %v1710, %v1720
          %v1731 = vsub.f32 %v1711, %v1721
          %v1732 = vsub.f32 %v1712, %v1722
          %v1733 = vsub.f32 %v1713, %v1723
          %v1734 = vsub.f32 %v1714, %v1724
          %v1735 = vsub.f32 %v1715, %v1725
          %v1736 = vsub.f32 %v1716, %v1726
          %v1737 = vadd.f32 %v1727, 0.001
          %v1738 = vadd.f32 %v1728, 0.001
          %v1739 = vadd.f32 %v1729, 0.001
          %v1740 = vadd.f32 %v1730, 0.001
          %v1741 = vadd.f32 %v1731, 0.001
          %v1742 = vadd.f32 %v1732, 0.001
          %v1743 = vadd.f32 %v1733, 0.001
          %v1744 = vadd.f32 %v1734, 0.001
          %v1745 = vadd.f32 %v1735, 0.001
          %v1746 = vadd.f32 %v1736, 0.001
          %v1747 = vrsqrt.pop %v1737
          %v1748 = vrsqrt.pop %v1738
          %v1749 = vrsqrt.pop %v1739
          %v1750 = vrsqrt.pop %v1740
          %v1751 = vrsqrt.pop %v1741
          %v1752 = vrsqrt.pop %v1742
          %v1753 = vrsqrt.pop %v1743
          %v1754 = vrsqrt.pop %v1744
          %v1755 = vrsqrt.pop %v1745
          %v1756 = vrsqrt.pop %v1746
          %v1757 = vld [vmem:[%s369] sm:$0xff]
          %v1758 = vld [vmem:[%s369 + $0x8] sm:$0xff]
          %v1759 = vld [vmem:[%s369 + $0x10] sm:$0xff]
          %v1760 = vld [vmem:[%s369 + $0x18] sm:$0xff]
          %v1761 = vld [vmem:[%s369 + $0x20] sm:$0xff]
          %v1762 = vld [vmem:[%s369 + $0x28] sm:$0xff]
          %v1763 = vld [vmem:[%s369 + $0x30] sm:$0xff]
          %v1764 = vld [vmem:[%s369 + $0x38] sm:$0xff]
          %v1765 = vld [vmem:[%s369 + $0x40] sm:$0xff]
          %v1766 = vld [vmem:[%s369 + $0x48] sm:$0xff]
          %v1767 = vmul.f32 %v1747, %v1757
          %v1768 = vmul.f32 %v1748, %v1758
          %v1769 = vmul.f32 %v1749, %v1759
          %v1770 = vmul.f32 %v1750, %v1760
          %v1771 = vmul.f32 %v1751, %v1761
          %v1772 = vmul.f32 %v1752, %v1762
          %v1773 = vmul.f32 %v1753, %v1763
          %v1774 = vmul.f32 %v1754, %v1764
          %v1775 = vmul.f32 %v1755, %v1765
          %v1776 = vmul.f32 %v1756, %v1766
          %v1777 = vld [vmem:[%s375] sm:$0xff]
          %v1778 = vld [vmem:[%s375 + $0x8] sm:$0xff]
          %v1779 = vld [vmem:[%s375 + $0x10] sm:$0xff]
          %v1780 = vld [vmem:[%s375 + $0x18] sm:$0xff]
          %v1781 = vld [vmem:[%s375 + $0x20] sm:$0xff]
          %v1782 = vld [vmem:[%s375 + $0x28] sm:$0xff]
          %v1783 = vld [vmem:[%s375 + $0x30] sm:$0xff]
          %v1784 = vld [vmem:[%s375 + $0x38] sm:$0xff]
          %v1785 = vld [vmem:[%s375 + $0x40] sm:$0xff]
          %v1786 = vld [vmem:[%s375 + $0x48] sm:$0xff]
          %v1787 = vmul.f32 %v1697, %v1767
          %v1788 = vmul.f32 %v1698, %v1768
          %v1789 = vmul.f32 %v1699, %v1769
          %v1790 = vmul.f32 %v1700, %v1770
          %v1791 = vmul.f32 %v1701, %v1771
          %v1792 = vmul.f32 %v1702, %v1772
          %v1793 = vmul.f32 %v1703, %v1773
          %v1794 = vmul.f32 %v1704, %v1774
          %v1795 = vmul.f32 %v1705, %v1775
          %v1796 = vmul.f32 %v1706, %v1776
          %v1797 = vsub.f32 %v1777, %v1787
          %v1798 = vsub.f32 %v1778, %v1788
          %v1799 = vsub.f32 %v1779, %v1789
          %v1800 = vsub.f32 %v1780, %v1790
          %v1801 = vsub.f32 %v1781, %v1791
          %v1802 = vsub.f32 %v1782, %v1792
          %v1803 = vsub.f32 %v1783, %v1793
          %v1804 = vsub.f32 %v1784, %v1794
          %v1805 = vsub.f32 %v1785, %v1795
          %v1806 = vsub.f32 %v1786, %v1796
          %1808 = vset.pattern.permute.xlu0 0
          %1809 = vperm.xlu0 %1808, %v1767
          %v1810 = vpop.permute.xlu0 %1809
          %1813 = vset.pattern.permute.xlu0 0
          %1814 = vperm.xlu0 %1813, %v1768
          %v1815 = vpop.permute.xlu0 %1814
          %1818 = vset.pattern.permute.xlu0 0
          %1819 = vperm.xlu0 %1818, %v1769
          %v1820 = vpop.permute.xlu0 %1819
          %1823 = vset.pattern.permute.xlu0 0
          %1824 = vperm.xlu0 %1823, %v1770
          %v1825 = vpop.permute.xlu0 %1824
          %1828 = vset.pattern.permute.xlu0 0
          %1829 = vperm.xlu0 %1828, %v1771
          %v1830 = vpop.permute.xlu0 %1829
          %1833 = vset.pattern.permute.xlu0 0
          %1834 = vperm.xlu0 %1833, %v1772
          %v1835 = vpop.permute.xlu0 %1834
          %1838 = vset.pattern.permute.xlu0 0
          %1839 = vperm.xlu0 %1838, %v1773
          %v1840 = vpop.permute.xlu0 %1839
          %1843 = vset.pattern.permute.xlu0 0
          %1844 = vperm.xlu0 %1843, %v1774
          %v1845 = vpop.permute.xlu0 %1844
          %1848 = vset.pattern.permute.xlu0 0
          %1849 = vperm.xlu0 %1848, %v1775
          %v1850 = vpop.permute.xlu0 %1849
          %1853 = vset.pattern.permute.xlu0 0
          %1854 = vperm.xlu0 %1853, %v1776
          %v1855 = vpop.permute.xlu0 %1854
          %v1857 = vmul.f32 %v1397, %v1810
          %v1858 = vmul.f32 %v1398, %v1810
          %v1859 = vmul.f32 %v1399, %v1810
          %v1860 = vmul.f32 %v1400, %v1810
          %v1861 = vmul.f32 %v1401, %v1810
          %v1862 = vmul.f32 %v1402, %v1810
          %v1863 = vmul.f32 %v1403, %v1810
          %v1864 = vmul.f32 %v1404, %v1815
          %v1865 = vmul.f32 %v1405, %v1815
          %v1866 = vmul.f32 %v1406, %v1815
          %v1867 = vmul.f32 %v1407, %v1815
          %v1868 = vmul.f32 %v1408, %v1815
          %v1869 = vmul.f32 %v1409, %v1815
          %v1870 = vmul.f32 %v1410, %v1815
          %v1871 = vmul.f32 %v1411, %v1820
          %v1872 = vmul.f32 %v1412, %v1820
          %v1873 = vmul.f32 %v1413, %v1820
          %v1874 = vmul.f32 %v1414, %v1820
          %v1875 = vmul.f32 %v1415, %v1820
          %v1876 = vmul.f32 %v1416, %v1820
          %v1877 = vmul.f32 %v1417, %v1820
          %v1878 = vmul.f32 %v1418, %v1825
          %v1879 = vmul.f32 %v1419, %v1825
          %v1880 = vmul.f32 %v1420, %v1825
          %v1881 = vmul.f32 %v1421, %v1825
          %v1882 = vmul.f32 %v1422, %v1825
          %v1883 = vmul.f32 %v1423, %v1825
          %v1884 = vmul.f32 %v1424, %v1825
          %v1885 = vmul.f32 %v1425, %v1830
          %v1886 = vmul.f32 %v1426, %v1830
          %v1887 = vmul.f32 %v1427, %v1830
          %v1888 = vmul.f32 %v1428, %v1830
          %v1889 = vmul.f32 %v1429, %v1830
          %v1890 = vmul.f32 %v1430, %v1830
          %v1891 = vmul.f32 %v1431, %v1830
          %v1892 = vmul.f32 %v1432, %v1835
          %v1893 = vmul.f32 %v1433, %v1835
          %v1894 = vmul.f32 %v1434, %v1835
          %v1895 = vmul.f32 %v1435, %v1835
          %v1896 = vmul.f32 %v1436, %v1835
          %v1897 = vmul.f32 %v1437, %v1835
          %v1898 = vmul.f32 %v1438, %v1835
          %v1899 = vmul.f32 %v1439, %v1840
          %v1900 = vmul.f32 %v1440, %v1840
          %v1901 = vmul.f32 %v1441, %v1840
          %v1902 = vmul.f32 %v1442, %v1840
          %v1903 = vmul.f32 %v1443, %v1840
          %v1904 = vmul.f32 %v1444, %v1840
          %v1905 = vmul.f32 %v1445, %v1840
          %v1906 = vmul.f32 %v1446, %v1845
          %v1907 = vmul.f32 %v1447, %v1845
          %v1908 = vmul.f32 %v1448, %v1845
          %v1909 = vmul.f32 %v1449, %v1845
          %v1910 = vmul.f32 %v1450, %v1845
          %v1911 = vmul.f32 %v1451, %v1845
          %v1912 = vmul.f32 %v1452, %v1845
          %v1913 = vmul.f32 %v1453, %v1850
          %v1914 = vmul.f32 %v1454, %v1850
          %v1915 = vmul.f32 %v1455, %v1850
          %v1916 = vmul.f32 %v1456, %v1850
          %v1917 = vmul.f32 %v1457, %v1850
          %v1918 = vmul.f32 %v1458, %v1850
          %v1919 = vmul.f32 %v1459, %v1850
          %v1920 = vmul.f32 %v1460, %v1855
          %v1921 = vmul.f32 %v1461, %v1855
          %v1922 = vmul.f32 %v1462, %v1855
          %v1923 = vmul.f32 %v1463, %v1855
          %v1924 = vmul.f32 %v1464, %v1855
          %v1925 = vmul.f32 %v1465, %v1855
          %v1926 = vmul.f32 %v1466, %v1855
          %1928 = vset.pattern.permute.xlu0 0
          %1929 = vperm.xlu0 %1928, %v1797
          %v1930 = vpop.permute.xlu0 %1929
          %1933 = vset.pattern.permute.xlu0 0
          %1934 = vperm.xlu0 %1933, %v1798
          %v1935 = vpop.permute.xlu0 %1934
          %1938 = vset.pattern.permute.xlu0 0
          %1939 = vperm.xlu0 %1938, %v1799
          %v1940 = vpop.permute.xlu0 %1939
          %1943 = vset.pattern.permute.xlu0 0
          %1944 = vperm.xlu0 %1943, %v1800
          %v1945 = vpop.permute.xlu0 %1944
          %1948 = vset.pattern.permute.xlu0 0
          %1949 = vperm.xlu0 %1948, %v1801
          %v1950 = vpop.permute.xlu0 %1949
          %1953 = vset.pattern.permute.xlu0 0
          %1954 = vperm.xlu0 %1953, %v1802
          %v1955 = vpop.permute.xlu0 %1954
          %1958 = vset.pattern.permute.xlu0 0
          %1959 = vperm.xlu0 %1958, %v1803
          %v1960 = vpop.permute.xlu0 %1959
          %1963 = vset.pattern.permute.xlu0 0
          %1964 = vperm.xlu0 %1963, %v1804
          %v1965 = vpop.permute.xlu0 %1964
          %1968 = vset.pattern.permute.xlu0 0
          %1969 = vperm.xlu0 %1968, %v1805
          %v1970 = vpop.permute.xlu0 %1969
          %1973 = vset.pattern.permute.xlu0 0
          %1974 = vperm.xlu0 %1973, %v1806
          %v1975 = vpop.permute.xlu0 %1974
          %v1977 = vadd.f32 %v1857, %v1930
          %v1978 = vadd.f32 %v1858, %v1930
          %v1979 = vadd.f32 %v1859, %v1930
          %v1980 = vadd.f32 %v1860, %v1930
          %v1981 = vadd.f32 %v1861, %v1930
          %v1982 = vadd.f32 %v1862, %v1930
          %v1983 = vadd.f32 %v1863, %v1930
          %v1984 = vadd.f32 %v1864, %v1935
          %v1985 = vadd.f32 %v1865, %v1935
          %v1986 = vadd.f32 %v1866, %v1935
          %v1987 = vadd.f32 %v1867, %v1935
          %v1988 = vadd.f32 %v1868, %v1935
          %v1989 = vadd.f32 %v1869, %v1935
          %v1990 = vadd.f32 %v1870, %v1935
          %v1991 = vadd.f32 %v1871, %v1940
          %v1992 = vadd.f32 %v1872, %v1940
          %v1993 = vadd.f32 %v1873, %v1940
          %v1994 = vadd.f32 %v1874, %v1940
          %v1995 = vadd.f32 %v1875, %v1940
          %v1996 = vadd.f32 %v1876, %v1940
          %v1997 = vadd.f32 %v1877, %v1940
          %v1998 = vadd.f32 %v1878, %v1945
          %v1999 = vadd.f32 %v1879, %v1945
          %v2000 = vadd.f32 %v1880, %v1945
          %v2001 = vadd.f32 %v1881, %v1945
          %v2002 = vadd.f32 %v1882, %v1945
          %v2003 = vadd.f32 %v1883, %v1945
          %v2004 = vadd.f32 %v1884, %v1945
          %v2005 = vadd.f32 %v1885, %v1950
          %v2006 = vadd.f32 %v1886, %v1950
          %v2007 = vadd.f32 %v1887, %v1950
          %v2008 = vadd.f32 %v1888, %v1950
          %v2009 = vadd.f32 %v1889, %v1950
          %v2010 = vadd.f32 %v1890, %v1950
          %v2011 = vadd.f32 %v1891, %v1950
          %v2012 = vadd.f32 %v1892, %v1955
          %v2013 = vadd.f32 %v1893, %v1955
          %v2014 = vadd.f32 %v1894, %v1955
          %v2015 = vadd.f32 %v1895, %v1955
          %v2016 = vadd.f32 %v1896, %v1955
          %v2017 = vadd.f32 %v1897, %v1955
          %v2018 = vadd.f32 %v1898, %v1955
          %v2019 = vadd.f32 %v1899, %v1960
          %v2020 = vadd.f32 %v1900, %v1960
          %v2021 = vadd.f32 %v1901, %v1960
          %v2022 = vadd.f32 %v1902, %v1960
          %v2023 = vadd.f32 %v1903, %v1960
          %v2024 = vadd.f32 %v1904, %v1960
          %v2025 = vadd.f32 %v1905, %v1960
          %v2026 = vadd.f32 %v1906, %v1965
          %v2027 = vadd.f32 %v1907, %v1965
          %v2028 = vadd.f32 %v1908, %v1965
          %v2029 = vadd.f32 %v1909, %v1965
          %v2030 = vadd.f32 %v1910, %v1965
          %v2031 = vadd.f32 %v1911, %v1965
          %v2032 = vadd.f32 %v1912, %v1965
          %v2033 = vadd.f32 %v1913, %v1970
          %v2034 = vadd.f32 %v1914, %v1970
          %v2035 = vadd.f32 %v1915, %v1970
          %v2036 = vadd.f32 %v1916, %v1970
          %v2037 = vadd.f32 %v1917, %v1970
          %v2038 = vadd.f32 %v1918, %v1970
          %v2039 = vadd.f32 %v1919, %v1970
          %v2040 = vadd.f32 %v1920, %v1975
          %v2041 = vadd.f32 %v1921, %v1975
          %v2042 = vadd.f32 %v1922, %v1975
          %v2043 = vadd.f32 %v1923, %v1975
          %v2044 = vadd.f32 %v1924, %v1975
          %v2045 = vadd.f32 %v1925, %v1975
          %v2046 = vadd.f32 %v1926, %v1975
          %2047 = vst [vmem:[#allocation8] sm:$0xff] %v1977
          %2048 = vst [vmem:[#allocation8 + $0x8] sm:$0xff] %v1978
          %2049 = vst [vmem:[#allocation8 + $0x10] sm:$0xff] %v1979
          %2050 = vst [vmem:[#allocation8 + $0x18] sm:$0xff] %v1980
          %2051 = vst [vmem:[#allocation8 + $0x20] sm:$0xff] %v1981
          %2052 = vst [vmem:[#allocation8 + $0x28] sm:$0xff] %v1982
          %2053 = vst [vmem:[#allocation8 + $0x30] sm:$0xff] %v1983
          %2054 = vst [vmem:[#allocation8 + $0x38] sm:$0xff] %v1984
          %2055 = vst [vmem:[#allocation8 + $0x40] sm:$0xff] %v1985
          %2056 = vst [vmem:[#allocation8 + $0x48] sm:$0xff] %v1986
          %2057 = vst [vmem:[#allocation8 + $0x50] sm:$0xff] %v1987
          %2058 = vst [vmem:[#allocation8 + $0x58] sm:$0xff] %v1988
          %2059 = vst [vmem:[#allocation8 + $0x60] sm:$0xff] %v1989
          %2060 = vst [vmem:[#allocation8 + $0x68] sm:$0xff] %v1990
          %2061 = vst [vmem:[#allocation8 + $0x70] sm:$0xff] %v1991
          %2062 = vst [vmem:[#allocation8 + $0x78] sm:$0xff] %v1992
          %2063 = vst [vmem:[#allocation8 + $0x80] sm:$0xff] %v1993
          %2064 = vst [vmem:[#allocation8 + $0x88] sm:$0xff] %v1994
          %2065 = vst [vmem:[#allocation8 + $0x90] sm:$0xff] %v1995
          %2066 = vst [vmem:[#allocation8 + $0x98] sm:$0xff] %v1996
          %2067 = vst [vmem:[#allocation8 + $0xa0] sm:$0xff] %v1997
          %2068 = vst [vmem:[#allocation8 + $0xa8] sm:$0xff] %v1998
          %2069 = vst [vmem:[#allocation8 + $0xb0] sm:$0xff] %v1999
          %2070 = vst [vmem:[#allocation8 + $0xb8] sm:$0xff] %v2000
          %2071 = vst [vmem:[#allocation8 + $0xc0] sm:$0xff] %v2001
          %2072 = vst [vmem:[#allocation8 + $0xc8] sm:$0xff] %v2002
          %2073 = vst [vmem:[#allocation8 + $0xd0] sm:$0xff] %v2003
          %2074 = vst [vmem:[#allocation8 + $0xd8] sm:$0xff] %v2004
          %2075 = vst [vmem:[#allocation8 + $0xe0] sm:$0xff] %v2005
          %2076 = vst [vmem:[#allocation8 + $0xe8] sm:$0xff] %v2006
          %2077 = vst [vmem:[#allocation8 + $0xf0] sm:$0xff] %v2007
          %2078 = vst [vmem:[#allocation8 + $0xf8] sm:$0xff] %v2008
          %2079 = vst [vmem:[#allocation8 + $0x100] sm:$0xff] %v2009
          %2080 = vst [vmem:[#allocation8 + $0x108] sm:$0xff] %v2010
          %2081 = vst [vmem:[#allocation8 + $0x110] sm:$0xff] %v2011
          %2082 = vst [vmem:[#allocation8 + $0x118] sm:$0xff] %v2012
          %2083 = vst [vmem:[#allocation8 + $0x120] sm:$0xff] %v2013
          %2084 = vst [vmem:[#allocation8 + $0x128] sm:$0xff] %v2014
          %2085 = vst [vmem:[#allocation8 + $0x130] sm:$0xff] %v2015
          %2086 = vst [vmem:[#allocation8 + $0x138] sm:$0xff] %v2016
          %2087 = vst [vmem:[#allocation8 + $0x140] sm:$0xff] %v2017
          %2088 = vst [vmem:[#allocation8 + $0x148] sm:$0xff] %v2018
          %2089 = vst [vmem:[#allocation8 + $0x150] sm:$0xff] %v2019
          %2090 = vst [vmem:[#allocation8 + $0x158] sm:$0xff] %v2020
          %2091 = vst [vmem:[#allocation8 + $0x160] sm:$0xff] %v2021
          %2092 = vst [vmem:[#allocation8 + $0x168] sm:$0xff] %v2022
          %2093 = vst [vmem:[#allocation8 + $0x170] sm:$0xff] %v2023
          %2094 = vst [vmem:[#allocation8 + $0x178] sm:$0xff] %v2024
          %2095 = vst [vmem:[#allocation8 + $0x180] sm:$0xff] %v2025
          %2096 = vst [vmem:[#allocation8 + $0x188] sm:$0xff] %v2026
          %2097 = vst [vmem:[#allocation8 + $0x190] sm:$0xff] %v2027
          %2098 = vst [vmem:[#allocation8 + $0x198] sm:$0xff] %v2028
          %2099 = vst [vmem:[#allocation8 + $0x1a0] sm:$0xff] %v2029
          %2100 = vst [vmem:[#allocation8 + $0x1a8] sm:$0xff] %v2030
          %2101 = vst [vmem:[#allocation8 + $0x1b0] sm:$0xff] %v2031
          %2102 = vst [vmem:[#allocation8 + $0x1b8] sm:$0xff] %v2032
          %2103 = vst [vmem:[#allocation8 + $0x1c0] sm:$0xff] %v2033
          %2104 = vst [vmem:[#allocation8 + $0x1c8] sm:$0xff] %v2034
          %2105 = vst [vmem:[#allocation8 + $0x1d0] sm:$0xff] %v2035
          %2106 = vst [vmem:[#allocation8 + $0x1d8] sm:$0xff] %v2036
          %2107 = vst [vmem:[#allocation8 + $0x1e0] sm:$0xff] %v2037
          %2108 = vst [vmem:[#allocation8 + $0x1e8] sm:$0xff] %v2038
          %2109 = vst [vmem:[#allocation8 + $0x1f0] sm:$0xff] %v2039
          %2110 = vst [vmem:[#allocation8 + $0x1f8] sm:$0xff] %v2040
          %2111 = vst [vmem:[#allocation8 + $0x200] sm:$0xff] %v2041
          %2112 = vst [vmem:[#allocation8 + $0x208] sm:$0xff] %v2042
          %2113 = vst [vmem:[#allocation8 + $0x210] sm:$0xff] %v2043
          %2114 = vst [vmem:[#allocation8 + $0x218] sm:$0xff] %v2044
          %2115 = vst [vmem:[#allocation8 + $0x220] sm:$0xff] %v2045
          %2116 = vst [vmem:[#allocation8 + $0x228] sm:$0xff] %v2046
        $region64: #{tpu_custom_call.1} parent=39 // pred_fallthru
          _
        // Predicated region
        $region65: #{tpu_custom_call.1} parent=39 // pred_check
          %p2117 = pneg %p185
        $region66: #{tpu_custom_call.1} parent=39 // pred_check_branch
          %2119 = sbr.rel (%p2117) target = $region68
        $region67: #{tpu_custom_call.1} parent=39 // pred_region
          %s2120 = smul.u32 10, %s27
          %s2122 = ssub.s32 8960, 8960
          %2123 = vsyncadd [#allocation4], %s2122
          %s2124 = smul.addr %s2120, 7
          %s2125 = smul.addr %s2124, 128
          %s2126 = scalar_lea.hbm %s5, %s2125
          %s2127 = sshll.u32 [#allocation8], 4
          %s2128 = int_to_ptr.vmem [resolvable:$true] %s2127
          %2133 = dma.vmem_to_hbm [thread:$0]  %s2128, 8960, %s2126, [#allocation4], 896, 896, 56
        $region68: #{tpu_custom_call.1} parent=39 // pred_fallthru
          _
        // Predicated region
        $region69: #{tpu_custom_call.1} parent=39 // pred_check
          %p2134 = pneg %p185
        $region70: #{tpu_custom_call.1} parent=39 // pred_check_branch
          %2136 = sbr.rel (%p2134) target = $region72
        $region71: #{tpu_custom_call.1} parent=39 // pred_region
          %2137 = dma.done [#allocation4], 8960
        $region72: #{tpu_custom_call.1} parent=39 // pred_fallthru
          _
      $region40: #{tpu_custom_call.1} parent=5 // pred_fallthru
        _
      %p2138 = scmp.le.s32.totalorder 2, %s18
      // Predicated region
      $region73: #{tpu_custom_call.1} parent=5 // pred_check
        %p2139 = pneg %p2138
      $region74: #{tpu_custom_call.1} parent=5 // pred_check_branch
        %2141 = sbr.rel (%p2139) target = $region76
      $region75: #{tpu_custom_call.1} parent=5 // pred_region
        %s2142 = ssub.s32 %s18, 2
      $region76: #{tpu_custom_call.1} parent=5 // pred_fallthru
        _
    $region6: #{tpu_custom_call.1} parent=1 // loop_footer
      %s22 = sadd.s32 1, %s18
    $region7: #{tpu_custom_call.1} parent=1 // loop_footer_branch
      %17 = sbr.rel target = $region3
    $region8: #{tpu_custom_call.1} parent=1 // loop_exit
      _
    %2143 = vsyncpa [#allocation3], 1
    %s2144 = scalar_lea.sflag [#allocation3], 1
    %2145 = vsyncpa %s2144, 1
    %2146 = vsyncpa [#allocation6], 1
    %s2147 = scalar_lea.sflag [#allocation6], 1
    %2148 = vsyncpa %s2147, 1
    %2149 = vsyncpa [#allocation4], 1
    %s2150 = scalar_lea.sflag [#allocation4], 1
    %2151 = vsyncpa %s2150, 1

</llo_original>
